<compile_context>
chip_gen: v6e
topology: v6e:2x2x1
jax: 0.10.0
libtpu: 0.0.40
codegen_flags: <defaults>
</compile_context>

<pallas_src>
import math

import jax
import jax.numpy as jnp
from jax.experimental import pallas as pl

# ----------------------- scaled-down ViT configuration -----------------------
IMG = 32            # image H = W
PATCH = 16          # patch size (as in vit_b_16)
IN_CH = 3           # RGB
D = 32              # hidden dim          (768 in vit-base)
HEADS = 4           # attention heads     (12 in vit-base)
HEAD_DIM = D // HEADS
MLP = 64            # MLP dim             (3072 in vit-base)
LAYERS = 2          # encoder layers      (12 in vit-base)
NUM_CLASSES = 7     # FaceExpressionViT(num_classes=7)
B = 2               # batch
P = (IMG // PATCH) ** 2      # number of patches (4)
S = P + 1                    # true sequence length incl. class token (5)
S_PAD = 8                    # padded sequence length (sublane granularity)
N = B * S_PAD                # flattened token rows (16)
HS = HEADS * S_PAD           # head-replicated key axis (32)
FEAT = IN_CH * PATCH * PATCH # flattened patch features (768)
OUT_PAD = 128                # lane-dense padded logits width
EPS = 1e-6                   # LayerNorm eps used by torchvision ViT


# --------------------------------- kernel ------------------------------------
def _layernorm(x, gamma, beta):
    mu = jnp.mean(x, axis=-1, keepdims=True)
    var = jnp.mean((x - mu) ** 2, axis=-1, keepdims=True)
    return (x - mu) * jax.lax.rsqrt(var + EPS) * gamma + beta


def vit_fused_kernel(tok_ref, w_patch_ref, add_ref, head_mask_ref, sbias_ref,
                     ln1g_ref, ln1b_ref, wqkv_ref, bqkv_ref, wo_ref, bo_ref,
                     ln2g_ref, ln2b_ref, w1_ref, b1_ref, w2_ref, b2_ref,
                     lng_ref, lnb_ref, wh_ref, bh_ref,
                     out_ref):
    bf16 = jnp.bfloat16

    # ---- patch embedding: (N, 768) @ (768, D), bf16 in / f32 accumulate ----
    x = jnp.dot(tok_ref[...], w_patch_ref[...],
                preferred_element_type=jnp.float32)              # (N, D) f32
    x = x + add_ref[...]     # precomputed cls-token + conv-bias + pos-embed add

    head_mask = head_mask_ref[...]                               # (HS, D) f32 0/1
    s_bias = sbias_ref[...]                                      # (1, S_PAD, HS)

    for l in range(LAYERS):                                      # static unroll
        # ---------- pre-LN multi-head self-attention (all heads fused) ----------
        xn = _layernorm(x, ln1g_ref[l], ln1b_ref[l])             # f32
        qkv = jnp.dot(xn.astype(bf16), wqkv_ref[l],
                      preferred_element_type=jnp.float32) + bqkv_ref[l]   # (N, 3D)
        qkv3 = qkv.reshape(B, S_PAD, 3 * D)     # split at 8-sublane boundary (layout no-op)
        q = qkv3[:, :, :D]                      # q already scaled by 1/sqrt(HEAD_DIM)
        k = qkv3[:, :, D:2 * D]
        v = qkv3[:, :, 2 * D:]

        # Replicate K/V once per head along the key axis and zero the features
        # outside each head's block: per-head scores / contexts then come out
        # of single full-width batched matmuls (no per-head loop, no K=8 dots).
        k_rep = (jnp.concatenate([k] * HEADS, axis=1) * head_mask).astype(bf16)  # (B, HS, D)
        v_rep = (jnp.concatenate([v] * HEADS, axis=1) * head_mask).astype(bf16)

        s = jnp.einsum('bqd,bkd->bqk', q.astype(bf16), k_rep,
                       preferred_element_type=jnp.float32)       # (B, S_PAD, HS)
        s = s + s_bias                                           # -1e30 on padded key slots
        s = s - jnp.max(s, axis=-1, keepdims=True)               # shared row max (valid per head)
        p = jnp.exp(s)                                           # f32 softmax numerator

        # unnormalised per-head context, then per-head denominator broadcast
        # onto that head's feature block via one (N,HS)@(HS,D) matmul.
        o = jnp.einsum('bqk,bkd->bqd', p.astype(bf16), v_rep,
                       preferred_element_type=jnp.float32)       # (B, S_PAD, D)
        denom = jnp.dot(p.reshape(N, HS), head_mask,
                        preferred_element_type=jnp.float32)      # (N, D) f32
        ctx = o.reshape(N, D) * pl.reciprocal(denom, approx=True)
        attn = jnp.dot(ctx.astype(bf16), wo_ref[l],
                       preferred_element_type=jnp.float32) + bo_ref[l]
        x = x + attn

        # ---------- pre-LN MLP ----------
        xn2 = _layernorm(x, ln2g_ref[l], ln2b_ref[l])
        h1 = jnp.dot(xn2.astype(bf16), w1_ref[l],
                     preferred_element_type=jnp.float32) + b1_ref[l]
        # TODO(synk): torch nn.GELU() is exact erf-GELU; tanh approximation used here.
        h1 = jax.nn.gelu(h1, approximate=True)
        h2 = jnp.dot(h1.astype(bf16), w2_ref[l],
                     preferred_element_type=jnp.float32) + b2_ref[l]
        x = x + h2

    # ---------- final LN on class-token rows + classification head ----------
    cls = x.reshape(B, S_PAD, D)[:, 0, :]                        # (B, D)
    cls = _layernorm(cls, lng_ref[...], lnb_ref[...])
    out_ref[...] = jnp.dot(cls.astype(bf16), wh_ref[...],
                           preferred_element_type=jnp.float32) + bh_ref[...]


# -------------------------------- wrapper -------------------------------------
@jax.jit
def vit_forward(x, kernel_args):
    # Patchify NCHW (pure layout glue); flatten each patch in (C, ph, pw) order
    # to match a flattened Conv2d weight (D, C, p, p).
    xb = x.reshape(B, IN_CH, IMG // PATCH, PATCH, IMG // PATCH, PATCH)
    xb = xb.transpose(0, 2, 4, 1, 3, 5).reshape(B, P, FEAT)
    # One pad: row 0 (cls slot) and rows S..S_PAD-1 stay zero.
    tok = jnp.pad(xb, ((0, 0), (1, S_PAD - 1 - P), (0, 0))).reshape(N, FEAT)
    tok = tok.astype(jnp.bfloat16)

    out = pl.pallas_call(
        vit_fused_kernel,
        out_shape=jax.ShapeDtypeStruct((B, OUT_PAD), jnp.float32),
    )(tok, *kernel_args)
    return out[:, :NUM_CLASSES]


# ------------------------- deterministic parameters ---------------------------
def init_params(key):
    def nrm(k, shape, std=0.02):
        return jax.random.normal(k, shape, jnp.float32) * std

    keys = iter(jax.random.split(key, 32))

    # ---- raw (torch-equivalent) parameters, f32 ----
    w_patch = nrm(next(keys), (FEAT, D))        # conv_proj weight flattened (C*p*p, D)
    b_patch = nrm(next(keys), (D,))             # conv_proj bias
    cls_token = nrm(next(keys), (D,))
    pos_embed = nrm(next(keys), (S, D))
    ln_g = jnp.ones((1, D), jnp.float32)
    ln_b = jnp.zeros((1, D), jnp.float32)
    w_head = nrm(next(keys), (D, NUM_CLASSES))
    b_head = nrm(next(keys), (NUM_CLASSES,))

    ln1g = jnp.ones((LAYERS, 1, D), jnp.float32)
    ln1b = jnp.zeros((LAYERS, 1, D), jnp.float32)
    ln2g = jnp.ones((LAYERS, 1, D), jnp.float32)
    ln2b = jnp.zeros((LAYERS, 1, D), jnp.float32)
    wqkv = jnp.stack([nrm(next(keys), (D, 3 * D)) for _ in range(LAYERS)])
    bqkv = jnp.stack([nrm(next(keys), (1, 3 * D)) for _ in range(LAYERS)])
    wo = jnp.stack([nrm(next(keys), (D, D)) for _ in range(LAYERS)])
    bo = jnp.stack([nrm(next(keys), (1, D)) for _ in range(LAYERS)])
    w1 = jnp.stack([nrm(next(keys), (D, MLP)) for _ in range(LAYERS)])
    b1 = jnp.stack([nrm(next(keys), (1, MLP)) for _ in range(LAYERS)])
    w2 = jnp.stack([nrm(next(keys), (MLP, D)) for _ in range(LAYERS)])
    b2 = jnp.stack([nrm(next(keys), (1, D)) for _ in range(LAYERS)])

    # ---- one-time preprocessing hoisted out of the forward pass ----
    # (a) fold attention scale 1/sqrt(HEAD_DIM) into the q columns of wqkv/bqkv
    scale = 1.0 / math.sqrt(HEAD_DIM)
    qkv_scale = jnp.concatenate(
        [jnp.full((D,), scale, jnp.float32), jnp.ones((2 * D,), jnp.float32)])
    wqkv = wqkv * qkv_scale
    bqkv = bqkv * qkv_scale

    # (b) cls token + conv bias + positional embedding folded into one additive
    #     (N, D) tensor; padded rows stay exactly zero.
    add_tok = jnp.zeros((S_PAD, D), jnp.float32)
    add_tok = add_tok.at[0].set(cls_token + pos_embed[0])
    add_tok = add_tok.at[1:S].set(b_patch[None, :] + pos_embed[1:S])
    add_full = jnp.concatenate([add_tok] * B, axis=0)            # (N, D)

    # (c) attention constants: per-head feature-block mask and additive
    #     key-padding bias (computed once here, not per call / per layer).
    j = jnp.arange(HS)
    d = jnp.arange(D)
    head_mask = ((j[:, None] // S_PAD) == (d[None, :] // HEAD_DIM)).astype(jnp.float32)  # (HS, D)
    valid_key = (j % S_PAD) < S
    s_bias = jnp.where(jnp.broadcast_to(valid_key[None, None, :], (1, S_PAD, HS)),
                       0.0, -1e30).astype(jnp.float32)            # (1, S_PAD, HS)

    # (d) lane-dense padded classification head
    w_head_pad = jnp.zeros((D, OUT_PAD), jnp.float32).at[:, :NUM_CLASSES].set(w_head)
    b_head_pad = jnp.zeros((1, OUT_PAD), jnp.float32).at[:, :NUM_CLASSES].set(b_head)

    # (e) bf16 matmul weights (activations cast in-kernel; accumulation f32)
    bf = jnp.bfloat16
    kernel_args = (
        w_patch.astype(bf), add_full, head_mask, s_bias,
        ln1g, ln1b, wqkv.astype(bf), bqkv, wo.astype(bf), bo,
        ln2g, ln2b, w1.astype(bf), b1, w2.astype(bf), b2,
        ln_g, ln_b, w_head_pad.astype(bf), b_head_pad)
    return {"kernel_args": kernel_args}


# ----------------------------------- main --------------------------------------
if __name__ == "__main__":
    key = jax.random.PRNGKey(0)
    k_x, k_p = jax.random.split(key)
    x = jax.random.normal(k_x, (B, IN_CH, IMG, IMG), jnp.float32)  # NCHW like PyTorch
    params = init_params(k_p)

    logits = vit_forward(x, params["kernel_args"])
    logits = jax.block_until_ready(logits)
    assert logits.shape == (B, NUM_CLASSES), logits.shape
    assert bool(jnp.all(jnp.isfinite(logits)))
    print("KERNEL_OK")
</pallas_src>

<mosaic_0001>
module attributes {stable_mosaic.version = 11 : i64} {
  func.func @vit_fused_kernel(%arg0: memref<16x768xbf16, #tpu.memory_space<vmem>>, %arg1: memref<768x32xbf16, #tpu.memory_space<vmem>>, %arg2: memref<16x32xf32, #tpu.memory_space<vmem>>, %arg3: memref<32x32xf32, #tpu.memory_space<vmem>>, %arg4: memref<1x8x32xf32, #tpu.memory_space<vmem>>, %arg5: memref<2x1x32xf32, #tpu.memory_space<vmem>>, %arg6: memref<2x1x32xf32, #tpu.memory_space<vmem>>, %arg7: memref<2x32x96xbf16, #tpu.memory_space<vmem>>, %arg8: memref<2x1x96xf32, #tpu.memory_space<vmem>>, %arg9: memref<2x32x32xbf16, #tpu.memory_space<vmem>>, %arg10: memref<2x1x32xf32, #tpu.memory_space<vmem>>, %arg11: memref<2x1x32xf32, #tpu.memory_space<vmem>>, %arg12: memref<2x1x32xf32, #tpu.memory_space<vmem>>, %arg13: memref<2x32x64xbf16, #tpu.memory_space<vmem>>, %arg14: memref<2x1x64xf32, #tpu.memory_space<vmem>>, %arg15: memref<2x64x32xbf16, #tpu.memory_space<vmem>>, %arg16: memref<2x1x32xf32, #tpu.memory_space<vmem>>, %arg17: memref<1x32xf32, #tpu.memory_space<vmem>>, %arg18: memref<1x32xf32, #tpu.memory_space<vmem>>, %arg19: memref<32x128xbf16, #tpu.memory_space<vmem>>, %arg20: memref<1x128xf32, #tpu.memory_space<vmem>>, %arg21: memref<2x128xf32, #tpu.memory_space<vmem>>) attributes {dimension_semantics = [], scalar_prefetch = 0 : i64, scratch_operands = 0 : i64, tpu.core_type = #tpu.core_type<tc>} {
    %c0 = arith.constant 0 : index
    %c0_0 = arith.constant 0 : index
    %0 = vector.load %arg0[%c0, %c0_0] : memref<16x768xbf16, #tpu.memory_space<vmem>>, vector<16x768xbf16>
    %c0_1 = arith.constant 0 : index
    %c0_2 = arith.constant 0 : index
    %1 = vector.load %arg1[%c0_1, %c0_2] : memref<768x32xbf16, #tpu.memory_space<vmem>>, vector<768x32xbf16>
    %cst = arith.constant dense<0.000000e+00> : vector<16x32xf32>
    %2 = tpu.matmul %0, %1, %cst {dimension_numbers = #tpu.dot_dimension_numbers<[1], [0], [0], [1], [0, 0, 1, 1], [], []>} : vector<16x768xbf16>, vector<768x32xbf16>, vector<16x32xf32> -> vector<16x32xf32>
    %c0_3 = arith.constant 0 : index
    %c0_4 = arith.constant 0 : index
    %3 = vector.load %arg2[%c0_3, %c0_4] : memref<16x32xf32, #tpu.memory_space<vmem>>, vector<16x32xf32>
    %4 = arith.addf %2, %3 : vector<16x32xf32>
    %c0_5 = arith.constant 0 : index
    %c0_6 = arith.constant 0 : index
    %5 = vector.load %arg3[%c0_5, %c0_6] : memref<32x32xf32, #tpu.memory_space<vmem>>, vector<32x32xf32>
    %c0_7 = arith.constant 0 : index
    %c0_8 = arith.constant 0 : index
    %c0_9 = arith.constant 0 : index
    %6 = vector.load %arg4[%c0_7, %c0_8, %c0_9] : memref<1x8x32xf32, #tpu.memory_space<vmem>>, vector<1x8x32xf32>
    %c0_10 = arith.constant 0 : index
    %c0_11 = arith.constant 0 : index
    %c0_12 = arith.constant 0 : index
    %7 = vector.load %arg5[%c0_10, %c0_11, %c0_12] : memref<2x1x32xf32, #tpu.memory_space<vmem>>, vector<1x1x32xf32>
    %8 = vector.shape_cast %7 : vector<1x1x32xf32> to vector<1x32xf32>
    %c0_13 = arith.constant 0 : index
    %c0_14 = arith.constant 0 : index
    %c0_15 = arith.constant 0 : index
    %9 = vector.load %arg6[%c0_13, %c0_14, %c0_15] : memref<2x1x32xf32, #tpu.memory_space<vmem>>, vector<1x1x32xf32>
    %10 = vector.shape_cast %9 : vector<1x1x32xf32> to vector<1x32xf32>
    %cst_16 = arith.constant dense<0.000000e+00> : vector<16xf32>
    %11 = vector.multi_reduction <add>, %4, %cst_16 [1] : vector<16x32xf32> to vector<16xf32>
    %12 = vector.shape_cast %11 : vector<16xf32> to vector<16x1xf32>
    %cst_17 = arith.constant 3.200000e+01 : f32
    %13 = vector.broadcast %cst_17 : f32 to vector<16x1xf32>
    %14 = arith.divf %12, %13 : vector<16x1xf32>
    %15 = vector.broadcast %14 : vector<16x1xf32> to vector<16x32xf32>
    %16 = arith.subf %4, %15 : vector<16x32xf32>
    %17 = arith.mulf %16, %16 : vector<16x32xf32>
    %cst_18 = arith.constant dense<0.000000e+00> : vector<16xf32>
    %18 = vector.multi_reduction <add>, %17, %cst_18 [1] : vector<16x32xf32> to vector<16xf32>
    %19 = vector.shape_cast %18 : vector<16xf32> to vector<16x1xf32>
    %cst_19 = arith.constant 3.200000e+01 : f32
    %20 = vector.broadcast %cst_19 : f32 to vector<16x1xf32>
    %21 = arith.divf %19, %20 : vector<16x1xf32>
    %22 = vector.broadcast %14 : vector<16x1xf32> to vector<16x32xf32>
    %23 = arith.subf %4, %22 : vector<16x32xf32>
    %cst_20 = arith.constant 9.99999997E-7 : f32
    %24 = vector.broadcast %cst_20 : f32 to vector<16x1xf32>
    %25 = arith.addf %21, %24 : vector<16x1xf32>
    %26 = math.rsqrt %25 : vector<16x1xf32>
    %27 = vector.broadcast %26 : vector<16x1xf32> to vector<16x32xf32>
    %28 = arith.mulf %23, %27 : vector<16x32xf32>
    %29 = vector.broadcast %8 : vector<1x32xf32> to vector<16x32xf32>
    %30 = arith.mulf %28, %29 : vector<16x32xf32>
    %31 = vector.broadcast %10 : vector<1x32xf32> to vector<16x32xf32>
    %32 = arith.addf %30, %31 : vector<16x32xf32>
    %33 = arith.truncf %32 : vector<16x32xf32> to vector<16x32xbf16>
    %c0_21 = arith.constant 0 : index
    %c0_22 = arith.constant 0 : index
    %c0_23 = arith.constant 0 : index
    %34 = vector.load %arg7[%c0_21, %c0_22, %c0_23] : memref<2x32x96xbf16, #tpu.memory_space<vmem>>, vector<1x32x96xbf16>
    %35 = vector.shape_cast %34 : vector<1x32x96xbf16> to vector<32x96xbf16>
    %cst_24 = arith.constant dense<0.000000e+00> : vector<16x96xf32>
    %36 = tpu.matmul %33, %35, %cst_24 {dimension_numbers = #tpu.dot_dimension_numbers<[1], [0], [0], [1], [0, 0, 1, 1], [], []>} : vector<16x32xbf16>, vector<32x96xbf16>, vector<16x96xf32> -> vector<16x96xf32>
    %c0_25 = arith.constant 0 : index
    %c0_26 = arith.constant 0 : index
    %c0_27 = arith.constant 0 : index
    %37 = vector.load %arg8[%c0_25, %c0_26, %c0_27] : memref<2x1x96xf32, #tpu.memory_space<vmem>>, vector<1x1x96xf32>
    %38 = vector.shape_cast %37 : vector<1x1x96xf32> to vector<1x96xf32>
    %39 = vector.broadcast %38 : vector<1x96xf32> to vector<16x96xf32>
    %40 = arith.addf %36, %39 : vector<16x96xf32>
    %41 = vector.shape_cast %40 : vector<16x96xf32> to vector<2x8x96xf32>
    %42 = vector.extract_strided_slice %41 {offsets = [0, 0, 0], sizes = [2, 8, 32], strides = [1, 1, 1]} : vector<2x8x96xf32> to vector<2x8x32xf32>
    %43 = vector.extract_strided_slice %41 {offsets = [0, 0, 32], sizes = [2, 8, 32], strides = [1, 1, 1]} : vector<2x8x96xf32> to vector<2x8x32xf32>
    %44 = vector.extract_strided_slice %41 {offsets = [0, 0, 64], sizes = [2, 8, 32], strides = [1, 1, 1]} : vector<2x8x96xf32> to vector<2x8x32xf32>
    %45 = tpu.concatenate %43, %43, %43, %43 in 1 : vector<2x8x32xf32>, vector<2x8x32xf32>, vector<2x8x32xf32>, vector<2x8x32xf32> -> vector<2x32x32xf32>
    %46 = vector.shape_cast %5 : vector<32x32xf32> to vector<1x32x32xf32>
    %47 = vector.broadcast %46 : vector<1x32x32xf32> to vector<2x32x32xf32>
    %48 = arith.mulf %45, %47 : vector<2x32x32xf32>
    %49 = arith.truncf %48 : vector<2x32x32xf32> to vector<2x32x32xbf16>
    %50 = tpu.concatenate %44, %44, %44, %44 in 1 : vector<2x8x32xf32>, vector<2x8x32xf32>, vector<2x8x32xf32>, vector<2x8x32xf32> -> vector<2x32x32xf32>
    %51 = vector.shape_cast %5 : vector<32x32xf32> to vector<1x32x32xf32>
    %52 = vector.broadcast %51 : vector<1x32x32xf32> to vector<2x32x32xf32>
    %53 = arith.mulf %50, %52 : vector<2x32x32xf32>
    %54 = arith.truncf %53 : vector<2x32x32xf32> to vector<2x32x32xbf16>
    %55 = arith.truncf %42 : vector<2x8x32xf32> to vector<2x8x32xbf16>
    "tpu.trace_start"() <{level = 10 : i32, message = "bqd,bkd->bqk"}> : () -> ()
    %cst_28 = arith.constant dense<0.000000e+00> : vector<2x8x32xf32>
    %56 = tpu.matmul %55, %49, %cst_28 {dimension_numbers = #tpu.dot_dimension_numbers<[2], [2], [1], [1], [0, 0, 0, 1, 1, 1], [0], [0]>} : vector<2x8x32xbf16>, vector<2x32x32xbf16>, vector<2x8x32xf32> -> vector<2x8x32xf32>
    "tpu.trace_stop"() : () -> ()
    %57 = vector.broadcast %6 : vector<1x8x32xf32> to vector<2x8x32xf32>
    %58 = arith.addf %56, %57 : vector<2x8x32xf32>
    %cst_29 = arith.constant dense<0xFF800000> : vector<2x8xf32>
    %59 = vector.multi_reduction <maximumf>, %58, %cst_29 [2] : vector<2x8x32xf32> to vector<2x8xf32>
    %60 = vector.shape_cast %59 : vector<2x8xf32> to vector<2x8x1xf32>
    %61 = vector.broadcast %60 : vector<2x8x1xf32> to vector<2x8x32xf32>
    %62 = arith.subf %58, %61 : vector<2x8x32xf32>
    %63 = math.exp %62 : vector<2x8x32xf32>
    %64 = arith.truncf %63 : vector<2x8x32xf32> to vector<2x8x32xbf16>
    "tpu.trace_start"() <{level = 10 : i32, message = "bqk,bkd->bqd"}> : () -> ()
    %cst_30 = arith.constant dense<0.000000e+00> : vector<2x8x32xf32>
    %65 = tpu.matmul %64, %54, %cst_30 {dimension_numbers = #tpu.dot_dimension_numbers<[2], [1], [1], [2], [0, 0, 0, 1, 1, 2], [0], [0]>} : vector<2x8x32xbf16>, vector<2x32x32xbf16>, vector<2x8x32xf32> -> vector<2x8x32xf32>
    "tpu.trace_stop"() : () -> ()
    %66 = vector.shape_cast %63 : vector<2x8x32xf32> to vector<16x32xf32>
    %cst_31 = arith.constant dense<0.000000e+00> : vector<16x32xf32>
    %67 = tpu.matmul %66, %5, %cst_31 {dimension_numbers = #tpu.dot_dimension_numbers<[1], [0], [0], [1], [0, 0, 1, 1], [], []>} : vector<16x32xf32>, vector<32x32xf32>, vector<16x32xf32> -> vector<16x32xf32>
    %68 = vector.shape_cast %65 : vector<2x8x32xf32> to vector<16x32xf32>
    %69 = tpu.reciprocal %67 {approx = true} : vector<16x32xf32> -> vector<16x32xf32>
    %70 = arith.mulf %68, %69 : vector<16x32xf32>
    %71 = arith.truncf %70 : vector<16x32xf32> to vector<16x32xbf16>
    %c0_32 = arith.constant 0 : index
    %c0_33 = arith.constant 0 : index
    %c0_34 = arith.constant 0 : index
    %72 = vector.load %arg9[%c0_32, %c0_33, %c0_34] : memref<2x32x32xbf16, #tpu.memory_space<vmem>>, vector<1x32x32xbf16>
    %73 = vector.shape_cast %72 : vector<1x32x32xbf16> to vector<32x32xbf16>
    %cst_35 = arith.constant dense<0.000000e+00> : vector<16x32xf32>
    %74 = tpu.matmul %71, %73, %cst_35 {dimension_numbers = #tpu.dot_dimension_numbers<[1], [0], [0], [1], [0, 0, 1, 1], [], []>} : vector<16x32xbf16>, vector<32x32xbf16>, vector<16x32xf32> -> vector<16x32xf32>
    %c0_36 = arith.constant 0 : index
    %c0_37 = arith.constant 0 : index
    %c0_38 = arith.constant 0 : index
    %75 = vector.load %arg10[%c0_36, %c0_37, %c0_38] : memref<2x1x32xf32, #tpu.memory_space<vmem>>, vector<1x1x32xf32>
    %76 = vector.shape_cast %75 : vector<1x1x32xf32> to vector<1x32xf32>
    %77 = vector.broadcast %76 : vector<1x32xf32> to vector<16x32xf32>
    %78 = arith.addf %74, %77 : vector<16x32xf32>
    %79 = arith.addf %4, %78 : vector<16x32xf32>
    %c0_39 = arith.constant 0 : index
    %c0_40 = arith.constant 0 : index
    %c0_41 = arith.constant 0 : index
    %80 = vector.load %arg11[%c0_39, %c0_40, %c0_41] : memref<2x1x32xf32, #tpu.memory_space<vmem>>, vector<1x1x32xf32>
    %81 = vector.shape_cast %80 : vector<1x1x32xf32> to vector<1x32xf32>
    %c0_42 = arith.constant 0 : index
    %c0_43 = arith.constant 0 : index
    %c0_44 = arith.constant 0 : index
    %82 = vector.load %arg12[%c0_42, %c0_43, %c0_44] : memref<2x1x32xf32, #tpu.memory_space<vmem>>, vector<1x1x32xf32>
    %83 = vector.shape_cast %82 : vector<1x1x32xf32> to vector<1x32xf32>
    %cst_45 = arith.constant dense<0.000000e+00> : vector<16xf32>
    %84 = vector.multi_reduction <add>, %79, %cst_45 [1] : vector<16x32xf32> to vector<16xf32>
    %85 = vector.shape_cast %84 : vector<16xf32> to vector<16x1xf32>
    %cst_46 = arith.constant 3.200000e+01 : f32
    %86 = vector.broadcast %cst_46 : f32 to vector<16x1xf32>
    %87 = arith.divf %85, %86 : vector<16x1xf32>
    %88 = vector.broadcast %87 : vector<16x1xf32> to vector<16x32xf32>
    %89 = arith.subf %79, %88 : vector<16x32xf32>
    %90 = arith.mulf %89, %89 : vector<16x32xf32>
    %cst_47 = arith.constant dense<0.000000e+00> : vector<16xf32>
    %91 = vector.multi_reduction <add>, %90, %cst_47 [1] : vector<16x32xf32> to vector<16xf32>
    %92 = vector.shape_cast %91 : vector<16xf32> to vector<16x1xf32>
    %cst_48 = arith.constant 3.200000e+01 : f32
    %93 = vector.broadcast %cst_48 : f32 to vector<16x1xf32>
    %94 = arith.divf %92, %93 : vector<16x1xf32>
    %95 = vector.broadcast %87 : vector<16x1xf32> to vector<16x32xf32>
    %96 = arith.subf %79, %95 : vector<16x32xf32>
    %cst_49 = arith.constant 9.99999997E-7 : f32
    %97 = vector.broadcast %cst_49 : f32 to vector<16x1xf32>
    %98 = arith.addf %94, %97 : vector<16x1xf32>
    %99 = math.rsqrt %98 : vector<16x1xf32>
    %100 = vector.broadcast %99 : vector<16x1xf32> to vector<16x32xf32>
    %101 = arith.mulf %96, %100 : vector<16x32xf32>
    %102 = vector.broadcast %81 : vector<1x32xf32> to vector<16x32xf32>
    %103 = arith.mulf %101, %102 : vector<16x32xf32>
    %104 = vector.broadcast %83 : vector<1x32xf32> to vector<16x32xf32>
    %105 = arith.addf %103, %104 : vector<16x32xf32>
    %106 = arith.truncf %105 : vector<16x32xf32> to vector<16x32xbf16>
    %c0_50 = arith.constant 0 : index
    %c0_51 = arith.constant 0 : index
    %c0_52 = arith.constant 0 : index
    %107 = vector.load %arg13[%c0_50, %c0_51, %c0_52] : memref<2x32x64xbf16, #tpu.memory_space<vmem>>, vector<1x32x64xbf16>
    %108 = vector.shape_cast %107 : vector<1x32x64xbf16> to vector<32x64xbf16>
    %cst_53 = arith.constant dense<0.000000e+00> : vector<16x64xf32>
    %109 = tpu.matmul %106, %108, %cst_53 {dimension_numbers = #tpu.dot_dimension_numbers<[1], [0], [0], [1], [0, 0, 1, 1], [], []>} : vector<16x32xbf16>, vector<32x64xbf16>, vector<16x64xf32> -> vector<16x64xf32>
    %c0_54 = arith.constant 0 : index
    %c0_55 = arith.constant 0 : index
    %c0_56 = arith.constant 0 : index
    %110 = vector.load %arg14[%c0_54, %c0_55, %c0_56] : memref<2x1x64xf32, #tpu.memory_space<vmem>>, vector<1x1x64xf32>
    %111 = vector.shape_cast %110 : vector<1x1x64xf32> to vector<1x64xf32>
    %112 = vector.broadcast %111 : vector<1x64xf32> to vector<16x64xf32>
    %113 = arith.addf %109, %112 : vector<16x64xf32>
    %114 = arith.mulf %113, %113 : vector<16x64xf32>
    %115 = arith.mulf %113, %114 : vector<16x64xf32>
    %cst_57 = arith.constant 4.471500e-02 : f32
    %116 = vector.broadcast %cst_57 : f32 to vector<16x64xf32>
    %117 = arith.mulf %116, %115 : vector<16x64xf32>
    %118 = arith.addf %113, %117 : vector<16x64xf32>
    %cst_58 = arith.constant 0.797884583 : f32
    %119 = vector.broadcast %cst_58 : f32 to vector<16x64xf32>
    %120 = arith.mulf %119, %118 : vector<16x64xf32>
    %121 = math.tanh %120 : vector<16x64xf32>
    %cst_59 = arith.constant 1.000000e+00 : f32
    %122 = vector.broadcast %cst_59 : f32 to vector<16x64xf32>
    %123 = arith.addf %122, %121 : vector<16x64xf32>
    %cst_60 = arith.constant 5.000000e-01 : f32
    %124 = vector.broadcast %cst_60 : f32 to vector<16x64xf32>
    %125 = arith.mulf %124, %123 : vector<16x64xf32>
    %126 = arith.mulf %113, %125 : vector<16x64xf32>
    %127 = arith.truncf %126 : vector<16x64xf32> to vector<16x64xbf16>
    %c0_61 = arith.constant 0 : index
    %c0_62 = arith.constant 0 : index
    %c0_63 = arith.constant 0 : index
    %128 = vector.load %arg15[%c0_61, %c0_62, %c0_63] : memref<2x64x32xbf16, #tpu.memory_space<vmem>>, vector<1x64x32xbf16>
    %129 = vector.shape_cast %128 : vector<1x64x32xbf16> to vector<64x32xbf16>
    %cst_64 = arith.constant dense<0.000000e+00> : vector<16x32xf32>
    %130 = tpu.matmul %127, %129, %cst_64 {dimension_numbers = #tpu.dot_dimension_numbers<[1], [0], [0], [1], [0, 0, 1, 1], [], []>} : vector<16x64xbf16>, vector<64x32xbf16>, vector<16x32xf32> -> vector<16x32xf32>
    %c0_65 = arith.constant 0 : index
    %c0_66 = arith.constant 0 : index
    %c0_67 = arith.constant 0 : index
    %131 = vector.load %arg16[%c0_65, %c0_66, %c0_67] : memref<2x1x32xf32, #tpu.memory_space<vmem>>, vector<1x1x32xf32>
    %132 = vector.shape_cast %131 : vector<1x1x32xf32> to vector<1x32xf32>
    %133 = vector.broadcast %132 : vector<1x32xf32> to vector<16x32xf32>
    %134 = arith.addf %130, %133 : vector<16x32xf32>
    %135 = arith.addf %79, %134 : vector<16x32xf32>
    %c1 = arith.constant 1 : index
    %c0_68 = arith.constant 0 : index
    %c0_69 = arith.constant 0 : index
    %136 = vector.load %arg5[%c1, %c0_68, %c0_69] : memref<2x1x32xf32, #tpu.memory_space<vmem>>, vector<1x1x32xf32>
    %137 = vector.shape_cast %136 : vector<1x1x32xf32> to vector<1x32xf32>
    %c1_70 = arith.constant 1 : index
    %c0_71 = arith.constant 0 : index
    %c0_72 = arith.constant 0 : index
    %138 = vector.load %arg6[%c1_70, %c0_71, %c0_72] : memref<2x1x32xf32, #tpu.memory_space<vmem>>, vector<1x1x32xf32>
    %139 = vector.shape_cast %138 : vector<1x1x32xf32> to vector<1x32xf32>
    %cst_73 = arith.constant dense<0.000000e+00> : vector<16xf32>
    %140 = vector.multi_reduction <add>, %135, %cst_73 [1] : vector<16x32xf32> to vector<16xf32>
    %141 = vector.shape_cast %140 : vector<16xf32> to vector<16x1xf32>
    %cst_74 = arith.constant 3.200000e+01 : f32
    %142 = vector.broadcast %cst_74 : f32 to vector<16x1xf32>
    %143 = arith.divf %141, %142 : vector<16x1xf32>
    %144 = vector.broadcast %143 : vector<16x1xf32> to vector<16x32xf32>
    %145 = arith.subf %135, %144 : vector<16x32xf32>
    %146 = arith.mulf %145, %145 : vector<16x32xf32>
    %cst_75 = arith.constant dense<0.000000e+00> : vector<16xf32>
    %147 = vector.multi_reduction <add>, %146, %cst_75 [1] : vector<16x32xf32> to vector<16xf32>
    %148 = vector.shape_cast %147 : vector<16xf32> to vector<16x1xf32>
    %cst_76 = arith.constant 3.200000e+01 : f32
    %149 = vector.broadcast %cst_76 : f32 to vector<16x1xf32>
    %150 = arith.divf %148, %149 : vector<16x1xf32>
    %151 = vector.broadcast %143 : vector<16x1xf32> to vector<16x32xf32>
    %152 = arith.subf %135, %151 : vector<16x32xf32>
    %cst_77 = arith.constant 9.99999997E-7 : f32
    %153 = vector.broadcast %cst_77 : f32 to vector<16x1xf32>
    %154 = arith.addf %150, %153 : vector<16x1xf32>
    %155 = math.rsqrt %154 : vector<16x1xf32>
    %156 = vector.broadcast %155 : vector<16x1xf32> to vector<16x32xf32>
    %157 = arith.mulf %152, %156 : vector<16x32xf32>
    %158 = vector.broadcast %137 : vector<1x32xf32> to vector<16x32xf32>
    %159 = arith.mulf %157, %158 : vector<16x32xf32>
    %160 = vector.broadcast %139 : vector<1x32xf32> to vector<16x32xf32>
    %161 = arith.addf %159, %160 : vector<16x32xf32>
    %162 = arith.truncf %161 : vector<16x32xf32> to vector<16x32xbf16>
    %c1_78 = arith.constant 1 : index
    %c0_79 = arith.constant 0 : index
    %c0_80 = arith.constant 0 : index
    %163 = vector.load %arg7[%c1_78, %c0_79, %c0_80] : memref<2x32x96xbf16, #tpu.memory_space<vmem>>, vector<1x32x96xbf16>
    %164 = vector.shape_cast %163 : vector<1x32x96xbf16> to vector<32x96xbf16>
    %cst_81 = arith.constant dense<0.000000e+00> : vector<16x96xf32>
    %165 = tpu.matmul %162, %164, %cst_81 {dimension_numbers = #tpu.dot_dimension_numbers<[1], [0], [0], [1], [0, 0, 1, 1], [], []>} : vector<16x32xbf16>, vector<32x96xbf16>, vector<16x96xf32> -> vector<16x96xf32>
    %c1_82 = arith.constant 1 : index
    %c0_83 = arith.constant 0 : index
    %c0_84 = arith.constant 0 : index
    %166 = vector.load %arg8[%c1_82, %c0_83, %c0_84] : memref<2x1x96xf32, #tpu.memory_space<vmem>>, vector<1x1x96xf32>
    %167 = vector.shape_cast %166 : vector<1x1x96xf32> to vector<1x96xf32>
    %168 = vector.broadcast %167 : vector<1x96xf32> to vector<16x96xf32>
    %169 = arith.addf %165, %168 : vector<16x96xf32>
    %170 = vector.shape_cast %169 : vector<16x96xf32> to vector<2x8x96xf32>
    %171 = vector.extract_strided_slice %170 {offsets = [0, 0, 0], sizes = [2, 8, 32], strides = [1, 1, 1]} : vector<2x8x96xf32> to vector<2x8x32xf32>
    %172 = vector.extract_strided_slice %170 {offsets = [0, 0, 32], sizes = [2, 8, 32], strides = [1, 1, 1]} : vector<2x8x96xf32> to vector<2x8x32xf32>
    %173 = vector.extract_strided_slice %170 {offsets = [0, 0, 64], sizes = [2, 8, 32], strides = [1, 1, 1]} : vector<2x8x96xf32> to vector<2x8x32xf32>
    %174 = tpu.concatenate %172, %172, %172, %172 in 1 : vector<2x8x32xf32>, vector<2x8x32xf32>, vector<2x8x32xf32>, vector<2x8x32xf32> -> vector<2x32x32xf32>
    %175 = vector.shape_cast %5 : vector<32x32xf32> to vector<1x32x32xf32>
    %176 = vector.broadcast %175 : vector<1x32x32xf32> to vector<2x32x32xf32>
    %177 = arith.mulf %174, %176 : vector<2x32x32xf32>
    %178 = arith.truncf %177 : vector<2x32x32xf32> to vector<2x32x32xbf16>
    %179 = tpu.concatenate %173, %173, %173, %173 in 1 : vector<2x8x32xf32>, vector<2x8x32xf32>, vector<2x8x32xf32>, vector<2x8x32xf32> -> vector<2x32x32xf32>
    %180 = vector.shape_cast %5 : vector<32x32xf32> to vector<1x32x32xf32>
    %181 = vector.broadcast %180 : vector<1x32x32xf32> to vector<2x32x32xf32>
    %182 = arith.mulf %179, %181 : vector<2x32x32xf32>
    %183 = arith.truncf %182 : vector<2x32x32xf32> to vector<2x32x32xbf16>
    %184 = arith.truncf %171 : vector<2x8x32xf32> to vector<2x8x32xbf16>
    "tpu.trace_start"() <{level = 10 : i32, message = "bqd,bkd->bqk"}> : () -> ()
    %cst_85 = arith.constant dense<0.000000e+00> : vector<2x8x32xf32>
    %185 = tpu.matmul %184, %178, %cst_85 {dimension_numbers = #tpu.dot_dimension_numbers<[2], [2], [1], [1], [0, 0, 0, 1, 1, 1], [0], [0]>} : vector<2x8x32xbf16>, vector<2x32x32xbf16>, vector<2x8x32xf32> -> vector<2x8x32xf32>
    "tpu.trace_stop"() : () -> ()
    %186 = vector.broadcast %6 : vector<1x8x32xf32> to vector<2x8x32xf32>
    %187 = arith.addf %185, %186 : vector<2x8x32xf32>
    %cst_86 = arith.constant dense<0xFF800000> : vector<2x8xf32>
    %188 = vector.multi_reduction <maximumf>, %187, %cst_86 [2] : vector<2x8x32xf32> to vector<2x8xf32>
    %189 = vector.shape_cast %188 : vector<2x8xf32> to vector<2x8x1xf32>
    %190 = vector.broadcast %189 : vector<2x8x1xf32> to vector<2x8x32xf32>
    %191 = arith.subf %187, %190 : vector<2x8x32xf32>
    %192 = math.exp %191 : vector<2x8x32xf32>
    %193 = arith.truncf %192 : vector<2x8x32xf32> to vector<2x8x32xbf16>
    "tpu.trace_start"() <{level = 10 : i32, message = "bqk,bkd->bqd"}> : () -> ()
    %cst_87 = arith.constant dense<0.000000e+00> : vector<2x8x32xf32>
    %194 = tpu.matmul %193, %183, %cst_87 {dimension_numbers = #tpu.dot_dimension_numbers<[2], [1], [1], [2], [0, 0, 0, 1, 1, 2], [0], [0]>} : vector<2x8x32xbf16>, vector<2x32x32xbf16>, vector<2x8x32xf32> -> vector<2x8x32xf32>
    "tpu.trace_stop"() : () -> ()
    %195 = vector.shape_cast %192 : vector<2x8x32xf32> to vector<16x32xf32>
    %cst_88 = arith.constant dense<0.000000e+00> : vector<16x32xf32>
    %196 = tpu.matmul %195, %5, %cst_88 {dimension_numbers = #tpu.dot_dimension_numbers<[1], [0], [0], [1], [0, 0, 1, 1], [], []>} : vector<16x32xf32>, vector<32x32xf32>, vector<16x32xf32> -> vector<16x32xf32>
    %197 = vector.shape_cast %194 : vector<2x8x32xf32> to vector<16x32xf32>
    %198 = tpu.reciprocal %196 {approx = true} : vector<16x32xf32> -> vector<16x32xf32>
    %199 = arith.mulf %197, %198 : vector<16x32xf32>
    %200 = arith.truncf %199 : vector<16x32xf32> to vector<16x32xbf16>
    %c1_89 = arith.constant 1 : index
    %c0_90 = arith.constant 0 : index
    %c0_91 = arith.constant 0 : index
    %201 = vector.load %arg9[%c1_89, %c0_90, %c0_91] : memref<2x32x32xbf16, #tpu.memory_space<vmem>>, vector<1x32x32xbf16>
    %202 = vector.shape_cast %201 : vector<1x32x32xbf16> to vector<32x32xbf16>
    %cst_92 = arith.constant dense<0.000000e+00> : vector<16x32xf32>
    %203 = tpu.matmul %200, %202, %cst_92 {dimension_numbers = #tpu.dot_dimension_numbers<[1], [0], [0], [1], [0, 0, 1, 1], [], []>} : vector<16x32xbf16>, vector<32x32xbf16>, vector<16x32xf32> -> vector<16x32xf32>
    %c1_93 = arith.constant 1 : index
    %c0_94 = arith.constant 0 : index
    %c0_95 = arith.constant 0 : index
    %204 = vector.load %arg10[%c1_93, %c0_94, %c0_95] : memref<2x1x32xf32, #tpu.memory_space<vmem>>, vector<1x1x32xf32>
    %205 = vector.shape_cast %204 : vector<1x1x32xf32> to vector<1x32xf32>
    %206 = vector.broadcast %205 : vector<1x32xf32> to vector<16x32xf32>
    %207 = arith.addf %203, %206 : vector<16x32xf32>
    %208 = arith.addf %135, %207 : vector<16x32xf32>
    %c1_96 = arith.constant 1 : index
    %c0_97 = arith.constant 0 : index
    %c0_98 = arith.constant 0 : index
    %209 = vector.load %arg11[%c1_96, %c0_97, %c0_98] : memref<2x1x32xf32, #tpu.memory_space<vmem>>, vector<1x1x32xf32>
    %210 = vector.shape_cast %209 : vector<1x1x32xf32> to vector<1x32xf32>
    %c1_99 = arith.constant 1 : index
    %c0_100 = arith.constant 0 : index
    %c0_101 = arith.constant 0 : index
    %211 = vector.load %arg12[%c1_99, %c0_100, %c0_101] : memref<2x1x32xf32, #tpu.memory_space<vmem>>, vector<1x1x32xf32>
    %212 = vector.shape_cast %211 : vector<1x1x32xf32> to vector<1x32xf32>
    %cst_102 = arith.constant dense<0.000000e+00> : vector<16xf32>
    %213 = vector.multi_reduction <add>, %208, %cst_102 [1] : vector<16x32xf32> to vector<16xf32>
    %214 = vector.shape_cast %213 : vector<16xf32> to vector<16x1xf32>
    %cst_103 = arith.constant 3.200000e+01 : f32
    %215 = vector.broadcast %cst_103 : f32 to vector<16x1xf32>
    %216 = arith.divf %214, %215 : vector<16x1xf32>
    %217 = vector.broadcast %216 : vector<16x1xf32> to vector<16x32xf32>
    %218 = arith.subf %208, %217 : vector<16x32xf32>
    %219 = arith.mulf %218, %218 : vector<16x32xf32>
    %cst_104 = arith.constant dense<0.000000e+00> : vector<16xf32>
    %220 = vector.multi_reduction <add>, %219, %cst_104 [1] : vector<16x32xf32> to vector<16xf32>
    %221 = vector.shape_cast %220 : vector<16xf32> to vector<16x1xf32>
    %cst_105 = arith.constant 3.200000e+01 : f32
    %222 = vector.broadcast %cst_105 : f32 to vector<16x1xf32>
    %223 = arith.divf %221, %222 : vector<16x1xf32>
    %224 = vector.broadcast %216 : vector<16x1xf32> to vector<16x32xf32>
    %225 = arith.subf %208, %224 : vector<16x32xf32>
    %cst_106 = arith.constant 9.99999997E-7 : f32
    %226 = vector.broadcast %cst_106 : f32 to vector<16x1xf32>
    %227 = arith.addf %223, %226 : vector<16x1xf32>
    %228 = math.rsqrt %227 : vector<16x1xf32>
    %229 = vector.broadcast %228 : vector<16x1xf32> to vector<16x32xf32>
    %230 = arith.mulf %225, %229 : vector<16x32xf32>
    %231 = vector.broadcast %210 : vector<1x32xf32> to vector<16x32xf32>
    %232 = arith.mulf %230, %231 : vector<16x32xf32>
    %233 = vector.broadcast %212 : vector<1x32xf32> to vector<16x32xf32>
    %234 = arith.addf %232, %233 : vector<16x32xf32>
    %235 = arith.truncf %234 : vector<16x32xf32> to vector<16x32xbf16>
    %c1_107 = arith.constant 1 : index
    %c0_108 = arith.constant 0 : index
    %c0_109 = arith.constant 0 : index
    %236 = vector.load %arg13[%c1_107, %c0_108, %c0_109] : memref<2x32x64xbf16, #tpu.memory_space<vmem>>, vector<1x32x64xbf16>
    %237 = vector.shape_cast %236 : vector<1x32x64xbf16> to vector<32x64xbf16>
    %cst_110 = arith.constant dense<0.000000e+00> : vector<16x64xf32>
    %238 = tpu.matmul %235, %237, %cst_110 {dimension_numbers = #tpu.dot_dimension_numbers<[1], [0], [0], [1], [0, 0, 1, 1], [], []>} : vector<16x32xbf16>, vector<32x64xbf16>, vector<16x64xf32> -> vector<16x64xf32>
    %c1_111 = arith.constant 1 : index
    %c0_112 = arith.constant 0 : index
    %c0_113 = arith.constant 0 : index
    %239 = vector.load %arg14[%c1_111, %c0_112, %c0_113] : memref<2x1x64xf32, #tpu.memory_space<vmem>>, vector<1x1x64xf32>
    %240 = vector.shape_cast %239 : vector<1x1x64xf32> to vector<1x64xf32>
    %241 = vector.broadcast %240 : vector<1x64xf32> to vector<16x64xf32>
    %242 = arith.addf %238, %241 : vector<16x64xf32>
    %243 = arith.mulf %242, %242 : vector<16x64xf32>
    %244 = arith.mulf %242, %243 : vector<16x64xf32>
    %cst_114 = arith.constant 4.471500e-02 : f32
    %245 = vector.broadcast %cst_114 : f32 to vector<16x64xf32>
    %246 = arith.mulf %245, %244 : vector<16x64xf32>
    %247 = arith.addf %242, %246 : vector<16x64xf32>
    %cst_115 = arith.constant 0.797884583 : f32
    %248 = vector.broadcast %cst_115 : f32 to vector<16x64xf32>
    %249 = arith.mulf %248, %247 : vector<16x64xf32>
    %250 = math.tanh %249 : vector<16x64xf32>
    %cst_116 = arith.constant 1.000000e+00 : f32
    %251 = vector.broadcast %cst_116 : f32 to vector<16x64xf32>
    %252 = arith.addf %251, %250 : vector<16x64xf32>
    %cst_117 = arith.constant 5.000000e-01 : f32
    %253 = vector.broadcast %cst_117 : f32 to vector<16x64xf32>
    %254 = arith.mulf %253, %252 : vector<16x64xf32>
    %255 = arith.mulf %242, %254 : vector<16x64xf32>
    %256 = arith.truncf %255 : vector<16x64xf32> to vector<16x64xbf16>
    %c1_118 = arith.constant 1 : index
    %c0_119 = arith.constant 0 : index
    %c0_120 = arith.constant 0 : index
    %257 = vector.load %arg15[%c1_118, %c0_119, %c0_120] : memref<2x64x32xbf16, #tpu.memory_space<vmem>>, vector<1x64x32xbf16>
    %258 = vector.shape_cast %257 : vector<1x64x32xbf16> to vector<64x32xbf16>
    %cst_121 = arith.constant dense<0.000000e+00> : vector<16x32xf32>
    %259 = tpu.matmul %256, %258, %cst_121 {dimension_numbers = #tpu.dot_dimension_numbers<[1], [0], [0], [1], [0, 0, 1, 1], [], []>} : vector<16x64xbf16>, vector<64x32xbf16>, vector<16x32xf32> -> vector<16x32xf32>
    %c1_122 = arith.constant 1 : index
    %c0_123 = arith.constant 0 : index
    %c0_124 = arith.constant 0 : index
    %260 = vector.load %arg16[%c1_122, %c0_123, %c0_124] : memref<2x1x32xf32, #tpu.memory_space<vmem>>, vector<1x1x32xf32>
    %261 = vector.shape_cast %260 : vector<1x1x32xf32> to vector<1x32xf32>
    %262 = vector.broadcast %261 : vector<1x32xf32> to vector<16x32xf32>
    %263 = arith.addf %259, %262 : vector<16x32xf32>
    %264 = arith.addf %208, %263 : vector<16x32xf32>
    %265 = vector.shape_cast %264 : vector<16x32xf32> to vector<2x8x32xf32>
    %266 = vector.extract_strided_slice %265 {offsets = [0, 0, 0], sizes = [2, 1, 32], strides = [1, 1, 1]} : vector<2x8x32xf32> to vector<2x1x32xf32>
    %267 = vector.shape_cast %266 : vector<2x1x32xf32> to vector<2x32xf32>
    %c0_125 = arith.constant 0 : index
    %c0_126 = arith.constant 0 : index
    %268 = vector.load %arg17[%c0_125, %c0_126] : memref<1x32xf32, #tpu.memory_space<vmem>>, vector<1x32xf32>
    %c0_127 = arith.constant 0 : index
    %c0_128 = arith.constant 0 : index
    %269 = vector.load %arg18[%c0_127, %c0_128] : memref<1x32xf32, #tpu.memory_space<vmem>>, vector<1x32xf32>
    %cst_129 = arith.constant dense<0.000000e+00> : vector<2xf32>
    %270 = vector.multi_reduction <add>, %267, %cst_129 [1] : vector<2x32xf32> to vector<2xf32>
    %271 = vector.shape_cast %270 : vector<2xf32> to vector<2x1xf32>
    %cst_130 = arith.constant 3.200000e+01 : f32
    %272 = vector.broadcast %cst_130 : f32 to vector<2x1xf32>
    %273 = arith.divf %271, %272 : vector<2x1xf32>
    %274 = vector.broadcast %273 : vector<2x1xf32> to vector<2x32xf32>
    %275 = arith.subf %267, %274 : vector<2x32xf32>
    %276 = arith.mulf %275, %275 : vector<2x32xf32>
    %cst_131 = arith.constant dense<0.000000e+00> : vector<2xf32>
    %277 = vector.multi_reduction <add>, %276, %cst_131 [1] : vector<2x32xf32> to vector<2xf32>
    %278 = vector.shape_cast %277 : vector<2xf32> to vector<2x1xf32>
    %cst_132 = arith.constant 3.200000e+01 : f32
    %279 = vector.broadcast %cst_132 : f32 to vector<2x1xf32>
    %280 = arith.divf %278, %279 : vector<2x1xf32>
    %281 = vector.broadcast %273 : vector<2x1xf32> to vector<2x32xf32>
    %282 = arith.subf %267, %281 : vector<2x32xf32>
    %cst_133 = arith.constant 9.99999997E-7 : f32
    %283 = vector.broadcast %cst_133 : f32 to vector<2x1xf32>
    %284 = arith.addf %280, %283 : vector<2x1xf32>
    %285 = math.rsqrt %284 : vector<2x1xf32>
    %286 = vector.broadcast %285 : vector<2x1xf32> to vector<2x32xf32>
    %287 = arith.mulf %282, %286 : vector<2x32xf32>
    %288 = vector.broadcast %268 : vector<1x32xf32> to vector<2x32xf32>
    %289 = arith.mulf %287, %288 : vector<2x32xf32>
    %290 = vector.broadcast %269 : vector<1x32xf32> to vector<2x32xf32>
    %291 = arith.addf %289, %290 : vector<2x32xf32>
    %292 = arith.truncf %291 : vector<2x32xf32> to vector<2x32xbf16>
    %c0_134 = arith.constant 0 : index
    %c0_135 = arith.constant 0 : index
    %293 = vector.load %arg19[%c0_134, %c0_135] : memref<32x128xbf16, #tpu.memory_space<vmem>>, vector<32x128xbf16>
    %cst_136 = arith.constant dense<0.000000e+00> : vector<2x128xf32>
    %294 = tpu.matmul %292, %293, %cst_136 {dimension_numbers = #tpu.dot_dimension_numbers<[1], [0], [0], [1], [0, 0, 1, 1], [], []>} : vector<2x32xbf16>, vector<32x128xbf16>, vector<2x128xf32> -> vector<2x128xf32>
    %c0_137 = arith.constant 0 : index
    %c0_138 = arith.constant 0 : index
    %295 = vector.load %arg20[%c0_137, %c0_138] : memref<1x128xf32, #tpu.memory_space<vmem>>, vector<1x128xf32>
    %296 = vector.broadcast %295 : vector<1x128xf32> to vector<2x128xf32>
    %297 = arith.addf %294, %296 : vector<2x128xf32>
    %c0_139 = arith.constant 0 : index
    %c0_140 = arith.constant 0 : index
    %298 = vector.load %arg21[%c0_139, %c0_140] : memref<2x128xf32, #tpu.memory_space<vmem>>, vector<2x128xf32>
    tpu.vector_store %arg21[%c0_139, %c0_140], %297 {strides = array<i32>} : memref<2x128xf32, #tpu.memory_space<vmem>>, vector<2x128xf32>,
    return
  }
}

</mosaic_0001>

<llo_original>
// kernel: vit_forward.1
$region0: #{vit_forward.1}
  #allocation0 [shape = 'u32[]', space=smem, size = 0x4, offset = 0x4, fixed_abs, tag = 'smem constant byte address 0x4 - core index']
  #allocation1 [shape = 'u32[144,128]{1,0:T(1,128)}', space=vmem, size = 0x12000, scoped, tag = 'internal scratch']
  %s0 = inlined_call_operand.vmem [shape: bf16[16,768], index: 0, kind: input, shape index: {}]
  %s1 = inlined_call_operand.vmem [shape: bf16[768,32], index: 1, kind: input, shape index: {}]
  %s2 = inlined_call_operand.vmem [shape: f32[16,32], index: 2, kind: input, shape index: {}]
  %s3 = inlined_call_operand.vmem [shape: f32[32,32], index: 3, kind: input, shape index: {}]
  %s4 = inlined_call_operand.vmem [shape: f32[1,8,32], index: 4, kind: input, shape index: {}]
  %s5 = inlined_call_operand.vmem [shape: f32[2,1,32], index: 5, kind: input, shape index: {}]
  %s6 = inlined_call_operand.vmem [shape: f32[2,1,32], index: 6, kind: input, shape index: {}]
  %s7 = inlined_call_operand.vmem [shape: bf16[2,32,96], index: 7, kind: input, shape index: {}]
  %s8 = inlined_call_operand.vmem [shape: f32[2,1,96], index: 8, kind: input, shape index: {}]
  %s9 = inlined_call_operand.vmem [shape: bf16[2,32,32], index: 9, kind: input, shape index: {}]
  %s10 = inlined_call_operand.vmem [shape: f32[2,1,32], index: 10, kind: input, shape index: {}]
  %s11 = inlined_call_operand.vmem [shape: f32[2,1,32], index: 11, kind: input, shape index: {}]
  %s12 = inlined_call_operand.vmem [shape: f32[2,1,32], index: 12, kind: input, shape index: {}]
  %s13 = inlined_call_operand.vmem [shape: bf16[2,32,64], index: 13, kind: input, shape index: {}]
  %s14 = inlined_call_operand.vmem [shape: f32[2,1,64], index: 14, kind: input, shape index: {}]
  %s15 = inlined_call_operand.vmem [shape: bf16[2,64,32], index: 15, kind: input, shape index: {}]
  %s16 = inlined_call_operand.vmem [shape: f32[2,1,32], index: 16, kind: input, shape index: {}]
  %s17 = inlined_call_operand.vmem [shape: f32[1,32], index: 17, kind: input, shape index: {}]
  %s18 = inlined_call_operand.vmem [shape: f32[1,32], index: 18, kind: input, shape index: {}]
  %s19 = inlined_call_operand.vmem [shape: bf16[32,128], index: 19, kind: input, shape index: {}]
  %s20 = inlined_call_operand.vmem [shape: f32[1,128], index: 20, kind: input, shape index: {}]
  %s21 = inlined_call_operand.hbm [shape: f32[2,128], index: 21, kind: output, shape index: {}]
  %s22 = sld [smem:[#allocation0]]
  $region94: #{vit_forward.1} parent=0
    _
  %s24 = ssub.s32 1, %s22
  %s25 = scalar_select 0, %s24, %s22
  $region1: #{vit_forward.1} parent=0
    #allocation2 [shape = 'u8[1024]{0}', space=vmem, size = 0x400, scoped, tag = 'output window, operand 0, single buffered']
    #allocation3 [shape = 's32[1]{0}', space=sflag, size = 0x4, scoped, tag = 'scoped memory for vit_forward.1']
    %26 = vsyncpa [#allocation3], 0
    // Predicated region
    $region2: #{vit_forward.1} parent=1 // pred_check
      _
    $region3: #{vit_forward.1} parent=1 // pred_check_branch
      %28 = sbr.rel (0) target = $region5
    $region4: #{vit_forward.1} parent=1 // pred_region
      _
    $region5: #{vit_forward.1} parent=1 // pred_fallthru
      _
    // Predicated region
    $region6: #{vit_forward.1} parent=1 // pred_check
      _
    $region7: #{vit_forward.1} parent=1 // pred_check_branch
      %30 = sbr.rel (0) target = $region9
    $region8: #{vit_forward.1} parent=1 // pred_region
      _
    $region9: #{vit_forward.1} parent=1 // pred_fallthru
      _
    // Predicated region
    $region10: #{vit_forward.1} parent=1 // pred_check
      _
    $region11: #{vit_forward.1} parent=1 // pred_check_branch
      %32 = sbr.rel (0) target = $region13
    $region12: #{vit_forward.1} parent=1 // pred_region
      _
    $region13: #{vit_forward.1} parent=1 // pred_fallthru
      _
    // Predicated region
    $region14: #{vit_forward.1} parent=1 // pred_check
      _
    $region15: #{vit_forward.1} parent=1 // pred_check_branch
      %34 = sbr.rel (0) target = $region17
    $region16: #{vit_forward.1} parent=1 // pred_region
      _
    $region17: #{vit_forward.1} parent=1 // pred_fallthru
      _
    // Predicated region
    $region18: #{vit_forward.1} parent=1 // pred_check
      _
    $region19: #{vit_forward.1} parent=1 // pred_check_branch
      %36 = sbr.rel (0) target = $region21
    $region20: #{vit_forward.1} parent=1 // pred_region
      _
    $region21: #{vit_forward.1} parent=1 // pred_fallthru
      _
    // Predicated region
    $region22: #{vit_forward.1} parent=1 // pred_check
      _
    $region23: #{vit_forward.1} parent=1 // pred_check_branch
      %38 = sbr.rel (0) target = $region25
    $region24: #{vit_forward.1} parent=1 // pred_region
      _
    $region25: #{vit_forward.1} parent=1 // pred_fallthru
      _
    // Predicated region
    $region26: #{vit_forward.1} parent=1 // pred_check
      _
    $region27: #{vit_forward.1} parent=1 // pred_check_branch
      %40 = sbr.rel (0) target = $region29
    $region28: #{vit_forward.1} parent=1 // pred_region
      _
    $region29: #{vit_forward.1} parent=1 // pred_fallthru
      _
    // Predicated region
    $region30: #{vit_forward.1} parent=1 // pred_check
      _
    $region31: #{vit_forward.1} parent=1 // pred_check_branch
      %42 = sbr.rel (0) target = $region33
    $region32: #{vit_forward.1} parent=1 // pred_region
      _
    $region33: #{vit_forward.1} parent=1 // pred_fallthru
      _
    // Predicated region
    $region34: #{vit_forward.1} parent=1 // pred_check
      _
    $region35: #{vit_forward.1} parent=1 // pred_check_branch
      %44 = sbr.rel (0) target = $region37
    $region36: #{vit_forward.1} parent=1 // pred_region
      _
    $region37: #{vit_forward.1} parent=1 // pred_fallthru
      _
    // Predicated region
    $region38: #{vit_forward.1} parent=1 // pred_check
      _
    $region39: #{vit_forward.1} parent=1 // pred_check_branch
      %46 = sbr.rel (0) target = $region41
    $region40: #{vit_forward.1} parent=1 // pred_region
      _
    $region41: #{vit_forward.1} parent=1 // pred_fallthru
      _
    // Predicated region
    $region42: #{vit_forward.1} parent=1 // pred_check
      _
    $region43: #{vit_forward.1} parent=1 // pred_check_branch
      %48 = sbr.rel (0) target = $region45
    $region44: #{vit_forward.1} parent=1 // pred_region
      _
    $region45: #{vit_forward.1} parent=1 // pred_fallthru
      _
    // Predicated region
    $region46: #{vit_forward.1} parent=1 // pred_check
      _
    $region47: #{vit_forward.1} parent=1 // pred_check_branch
      %50 = sbr.rel (0) target = $region49
    $region48: #{vit_forward.1} parent=1 // pred_region
      _
    $region49: #{vit_forward.1} parent=1 // pred_fallthru
      _
    // Predicated region
    $region50: #{vit_forward.1} parent=1 // pred_check
      _
    $region51: #{vit_forward.1} parent=1 // pred_check_branch
      %52 = sbr.rel (0) target = $region53
    $region52: #{vit_forward.1} parent=1 // pred_region
      _
    $region53: #{vit_forward.1} parent=1 // pred_fallthru
      _
    // Predicated region
    $region54: #{vit_forward.1} parent=1 // pred_check
      _
    $region55: #{vit_forward.1} parent=1 // pred_check_branch
      %54 = sbr.rel (0) target = $region57
    $region56: #{vit_forward.1} parent=1 // pred_region
      _
    $region57: #{vit_forward.1} parent=1 // pred_fallthru
      _
    // Predicated region
    $region58: #{vit_forward.1} parent=1 // pred_check
      _
    $region59: #{vit_forward.1} parent=1 // pred_check_branch
      %56 = sbr.rel (0) target = $region61
    $region60: #{vit_forward.1} parent=1 // pred_region
      _
    $region61: #{vit_forward.1} parent=1 // pred_fallthru
      _
    // Predicated region
    $region62: #{vit_forward.1} parent=1 // pred_check
      _
    $region63: #{vit_forward.1} parent=1 // pred_check_branch
      %58 = sbr.rel (0) target = $region65
    $region64: #{vit_forward.1} parent=1 // pred_region
      _
    $region65: #{vit_forward.1} parent=1 // pred_fallthru
      _
    // Predicated region
    $region66: #{vit_forward.1} parent=1 // pred_check
      _
    $region67: #{vit_forward.1} parent=1 // pred_check_branch
      %60 = sbr.rel (0) target = $region69
    $region68: #{vit_forward.1} parent=1 // pred_region
      _
    $region69: #{vit_forward.1} parent=1 // pred_fallthru
      _
    // Predicated region
    $region70: #{vit_forward.1} parent=1 // pred_check
      _
    $region71: #{vit_forward.1} parent=1 // pred_check_branch
      %62 = sbr.rel (0) target = $region73
    $region72: #{vit_forward.1} parent=1 // pred_region
      _
    $region73: #{vit_forward.1} parent=1 // pred_fallthru
      _
    // Predicated region
    $region74: #{vit_forward.1} parent=1 // pred_check
      _
    $region75: #{vit_forward.1} parent=1 // pred_check_branch
      %64 = sbr.rel (0) target = $region77
    $region76: #{vit_forward.1} parent=1 // pred_region
      _
    $region77: #{vit_forward.1} parent=1 // pred_fallthru
      _
    // Predicated region
    $region78: #{vit_forward.1} parent=1 // pred_check
      _
    $region79: #{vit_forward.1} parent=1 // pred_check_branch
      %66 = sbr.rel (0) target = $region81
    $region80: #{vit_forward.1} parent=1 // pred_region
      _
    $region81: #{vit_forward.1} parent=1 // pred_fallthru
      _
    // Predicated region
    $region82: #{vit_forward.1} parent=1 // pred_check
      _
    $region83: #{vit_forward.1} parent=1 // pred_check_branch
      %68 = sbr.rel (0) target = $region85
    $region84: #{vit_forward.1} parent=1 // pred_region
      _
    $region85: #{vit_forward.1} parent=1 // pred_fallthru
      _
    %v70 = vld [vmem:[%s0] sm:$0xff]
    %v71 = vld [vmem:[%s0 + $0x8] sm:$0xff]
    %v72 = vld [vmem:[%s0 + $0x10] sm:$0xff]
    %v73 = vld [vmem:[%s0 + $0x18] sm:$0xff]
    %v74 = vld [vmem:[%s0 + $0x20] sm:$0xff]
    %v75 = vld [vmem:[%s0 + $0x28] sm:$0xff]
    %v76 = vld [vmem:[%s1] sm:$0xf]
    %v77 = vld [vmem:[%s1 + $0x4] sm:$0xf]
    %v78 = vld [vmem:[%s1 + $0x8] sm:$0xf]
    %v79 = vld [vmem:[%s1 + $0xc] sm:$0xf]
    %v80 = vld [vmem:[%s1 + $0x10] sm:$0xf]
    %v81 = vld [vmem:[%s1 + $0x14] sm:$0xf]
    %v82 = vld [vmem:[%s1 + $0x18] sm:$0xf]
    %v83 = vld [vmem:[%s1 + $0x1c] sm:$0xf]
    %v84 = vld [vmem:[%s1 + $0x20] sm:$0xf]
    %v85 = vld [vmem:[%s1 + $0x24] sm:$0xf]
    %v86 = vld [vmem:[%s1 + $0x28] sm:$0xf]
    %v87 = vld [vmem:[%s1 + $0x2c] sm:$0xf]
    %v88 = vld [vmem:[%s1 + $0x30] sm:$0xf]
    %v89 = vld [vmem:[%s1 + $0x34] sm:$0xf]
    %v90 = vld [vmem:[%s1 + $0x38] sm:$0xf]
    %v91 = vld [vmem:[%s1 + $0x3c] sm:$0xf]
    %v92 = vld [vmem:[%s1 + $0x40] sm:$0xf]
    %v93 = vld [vmem:[%s1 + $0x44] sm:$0xf]
    %v94 = vld [vmem:[%s1 + $0x48] sm:$0xf]
    %v95 = vld [vmem:[%s1 + $0x4c] sm:$0xf]
    %v96 = vld [vmem:[%s1 + $0x50] sm:$0xf]
    %v97 = vld [vmem:[%s1 + $0x54] sm:$0xf]
    %v98 = vld [vmem:[%s1 + $0x58] sm:$0xf]
    %v99 = vld [vmem:[%s1 + $0x5c] sm:$0xf]
    %v100 = vld [vmem:[%s1 + $0x60] sm:$0xf]
    %v101 = vld [vmem:[%s1 + $0x64] sm:$0xf]
    %v102 = vld [vmem:[%s1 + $0x68] sm:$0xf]
    %v103 = vld [vmem:[%s1 + $0x6c] sm:$0xf]
    %v104 = vld [vmem:[%s1 + $0x70] sm:$0xf]
    %v105 = vld [vmem:[%s1 + $0x74] sm:$0xf]
    %v106 = vld [vmem:[%s1 + $0x78] sm:$0xf]
    %v107 = vld [vmem:[%s1 + $0x7c] sm:$0xf]
    %v108 = vld [vmem:[%s1 + $0x80] sm:$0xf]
    %v109 = vld [vmem:[%s1 + $0x84] sm:$0xf]
    %v110 = vld [vmem:[%s1 + $0x88] sm:$0xf]
    %v111 = vld [vmem:[%s1 + $0x8c] sm:$0xf]
    %v112 = vld [vmem:[%s1 + $0x90] sm:$0xf]
    %v113 = vld [vmem:[%s1 + $0x94] sm:$0xf]
    %v114 = vld [vmem:[%s1 + $0x98] sm:$0xf]
    %v115 = vld [vmem:[%s1 + $0x9c] sm:$0xf]
    %v116 = vld [vmem:[%s1 + $0xa0] sm:$0xf]
    %v117 = vld [vmem:[%s1 + $0xa4] sm:$0xf]
    %v118 = vld [vmem:[%s1 + $0xa8] sm:$0xf]
    %v119 = vld [vmem:[%s1 + $0xac] sm:$0xf]
    %v120 = vld [vmem:[%s1 + $0xb0] sm:$0xf]
    %v121 = vld [vmem:[%s1 + $0xb4] sm:$0xf]
    %v122 = vld [vmem:[%s1 + $0xb8] sm:$0xf]
    %v123 = vld [vmem:[%s1 + $0xbc] sm:$0xf]
    %v124 = vld [vmem:[%s1 + $0xc0] sm:$0xf]
    %v125 = vld [vmem:[%s1 + $0xc4] sm:$0xf]
    %v126 = vld [vmem:[%s1 + $0xc8] sm:$0xf]
    %v127 = vld [vmem:[%s1 + $0xcc] sm:$0xf]
    %v128 = vld [vmem:[%s1 + $0xd0] sm:$0xf]
    %v129 = vld [vmem:[%s1 + $0xd4] sm:$0xf]
    %v130 = vld [vmem:[%s1 + $0xd8] sm:$0xf]
    %v131 = vld [vmem:[%s1 + $0xdc] sm:$0xf]
    %v132 = vld [vmem:[%s1 + $0xe0] sm:$0xf]
    %v133 = vld [vmem:[%s1 + $0xe4] sm:$0xf]
    %v134 = vld [vmem:[%s1 + $0xe8] sm:$0xf]
    %v135 = vld [vmem:[%s1 + $0xec] sm:$0xf]
    %v136 = vld [vmem:[%s1 + $0xf0] sm:$0xf]
    %v137 = vld [vmem:[%s1 + $0xf4] sm:$0xf]
    %v138 = vld [vmem:[%s1 + $0xf8] sm:$0xf]
    %v139 = vld [vmem:[%s1 + $0xfc] sm:$0xf]
    %v140 = vld [vmem:[%s1 + $0x100] sm:$0xf]
    %v141 = vld [vmem:[%s1 + $0x104] sm:$0xf]
    %v142 = vld [vmem:[%s1 + $0x108] sm:$0xf]
    %v143 = vld [vmem:[%s1 + $0x10c] sm:$0xf]
    %v144 = vld [vmem:[%s1 + $0x110] sm:$0xf]
    %v145 = vld [vmem:[%s1 + $0x114] sm:$0xf]
    %v146 = vld [vmem:[%s1 + $0x118] sm:$0xf]
    %v147 = vld [vmem:[%s1 + $0x11c] sm:$0xf]
    %v148 = vld [vmem:[%s1 + $0x120] sm:$0xf]
    %v149 = vld [vmem:[%s1 + $0x124] sm:$0xf]
    %v150 = vld [vmem:[%s1 + $0x128] sm:$0xf]
    %v151 = vld [vmem:[%s1 + $0x12c] sm:$0xf]
    %v152 = vld [vmem:[%s1 + $0x130] sm:$0xf]
    %v153 = vld [vmem:[%s1 + $0x134] sm:$0xf]
    %v154 = vld [vmem:[%s1 + $0x138] sm:$0xf]
    %v155 = vld [vmem:[%s1 + $0x13c] sm:$0xf]
    %v156 = vld [vmem:[%s1 + $0x140] sm:$0xf]
    %v157 = vld [vmem:[%s1 + $0x144] sm:$0xf]
    %v158 = vld [vmem:[%s1 + $0x148] sm:$0xf]
    %v159 = vld [vmem:[%s1 + $0x14c] sm:$0xf]
    %v160 = vld [vmem:[%s1 + $0x150] sm:$0xf]
    %v161 = vld [vmem:[%s1 + $0x154] sm:$0xf]
    %v162 = vld [vmem:[%s1 + $0x158] sm:$0xf]
    %v163 = vld [vmem:[%s1 + $0x15c] sm:$0xf]
    %v164 = vld [vmem:[%s1 + $0x160] sm:$0xf]
    %v165 = vld [vmem:[%s1 + $0x164] sm:$0xf]
    %v166 = vld [vmem:[%s1 + $0x168] sm:$0xf]
    %v167 = vld [vmem:[%s1 + $0x16c] sm:$0xf]
    %v168 = vld [vmem:[%s1 + $0x170] sm:$0xf]
    %v169 = vld [vmem:[%s1 + $0x174] sm:$0xf]
    %v170 = vld [vmem:[%s1 + $0x178] sm:$0xf]
    %v171 = vld [vmem:[%s1 + $0x17c] sm:$0xf]
    %v172 = vld [vmem:[%s2] sm:$0xff]
    %v173 = vld [vmem:[%s2 + $0x8] sm:$0xff]
    %v180 = vunpack.c.l.b16 %v70
    %v181 = vunpack.c.h.b16 %v70
    %v182 = vunpack.c.l.b16 %v71
    %v183 = vunpack.c.h.b16 %v71
    %v184 = vunpack.c.l.b16 %v72
    %v185 = vunpack.c.h.b16 %v72
    %v186 = vunpack.c.l.b16 %v73
    %v187 = vunpack.c.h.b16 %v73
    %v188 = vunpack.c.l.b16 %v74
    %v189 = vunpack.c.h.b16 %v74
    %v190 = vunpack.c.l.b16 %v75
    %v191 = vunpack.c.h.b16 %v75
    %v192 = vpack.c.b16 %v186, %v180
    %v193 = vpack.c.b16 %v187, %v181
    %v194 = vpack.c.b16 %v188, %v182
    %v195 = vpack.c.b16 %v189, %v183
    %v196 = vpack.c.b16 %v190, %v184
    %v197 = vpack.c.b16 %v191, %v185
    %v300 = vunpack.c.l.b16 %v76
    %v301 = vunpack.c.l.b16 %v77
    %v302 = vunpack.c.l.b16 %v78
    %v303 = vunpack.c.l.b16 %v79
    %v304 = vunpack.c.l.b16 %v80
    %v305 = vunpack.c.l.b16 %v81
    %v306 = vunpack.c.l.b16 %v82
    %v307 = vunpack.c.l.b16 %v83
    %v308 = vunpack.c.l.b16 %v84
    %v309 = vunpack.c.l.b16 %v85
    %v310 = vunpack.c.l.b16 %v86
    %v311 = vunpack.c.l.b16 %v87
    %v312 = vunpack.c.l.b16 %v88
    %v313 = vunpack.c.l.b16 %v89
    %v314 = vunpack.c.l.b16 %v90
    %v315 = vunpack.c.l.b16 %v91
    %v316 = vunpack.c.l.b16 %v92
    %v317 = vunpack.c.l.b16 %v93
    %v318 = vunpack.c.l.b16 %v94
    %v319 = vunpack.c.l.b16 %v95
    %v320 = vunpack.c.l.b16 %v96
    %v321 = vunpack.c.l.b16 %v97
    %v322 = vunpack.c.l.b16 %v98
    %v323 = vunpack.c.l.b16 %v99
    %v324 = vunpack.c.l.b16 %v100
    %v325 = vunpack.c.l.b16 %v101
    %v326 = vunpack.c.l.b16 %v102
    %v327 = vunpack.c.l.b16 %v103
    %v328 = vunpack.c.l.b16 %v104
    %v329 = vunpack.c.l.b16 %v105
    %v330 = vunpack.c.l.b16 %v106
    %v331 = vunpack.c.l.b16 %v107
    %v332 = vunpack.c.l.b16 %v108
    %v333 = vunpack.c.l.b16 %v109
    %v334 = vunpack.c.l.b16 %v110
    %v335 = vunpack.c.l.b16 %v111
    %v336 = vunpack.c.l.b16 %v112
    %v337 = vunpack.c.l.b16 %v113
    %v338 = vunpack.c.l.b16 %v114
    %v339 = vunpack.c.l.b16 %v115
    %v340 = vunpack.c.l.b16 %v116
    %v341 = vunpack.c.l.b16 %v117
    %v342 = vunpack.c.l.b16 %v118
    %v343 = vunpack.c.l.b16 %v119
    %v344 = vunpack.c.l.b16 %v120
    %v345 = vunpack.c.l.b16 %v121
    %v346 = vunpack.c.l.b16 %v122
    %v347 = vunpack.c.l.b16 %v123
    %v348 = vunpack.c.l.b16 %v124
    %v349 = vunpack.c.l.b16 %v125
    %v350 = vunpack.c.l.b16 %v126
    %v351 = vunpack.c.l.b16 %v127
    %v352 = vunpack.c.l.b16 %v128
    %v353 = vunpack.c.l.b16 %v129
    %v354 = vunpack.c.l.b16 %v130
    %v355 = vunpack.c.l.b16 %v131
    %v356 = vunpack.c.l.b16 %v132
    %v357 = vunpack.c.l.b16 %v133
    %v358 = vunpack.c.l.b16 %v134
    %v359 = vunpack.c.l.b16 %v135
    %v360 = vunpack.c.l.b16 %v136
    %v361 = vunpack.c.l.b16 %v137
    %v362 = vunpack.c.l.b16 %v138
    %v363 = vunpack.c.l.b16 %v139
    %v364 = vunpack.c.l.b16 %v140
    %v365 = vunpack.c.l.b16 %v141
    %v366 = vunpack.c.l.b16 %v142
    %v367 = vunpack.c.l.b16 %v143
    %v368 = vunpack.c.l.b16 %v144
    %v369 = vunpack.c.l.b16 %v145
    %v370 = vunpack.c.l.b16 %v146
    %v371 = vunpack.c.l.b16 %v147
    %v372 = vunpack.c.l.b16 %v148
    %v373 = vunpack.c.l.b16 %v149
    %v374 = vunpack.c.l.b16 %v150
    %v375 = vunpack.c.l.b16 %v151
    %v376 = vunpack.c.l.b16 %v152
    %v377 = vunpack.c.l.b16 %v153
    %v378 = vunpack.c.l.b16 %v154
    %v379 = vunpack.c.l.b16 %v155
    %v380 = vunpack.c.l.b16 %v156
    %v381 = vunpack.c.l.b16 %v157
    %v382 = vunpack.c.l.b16 %v158
    %v383 = vunpack.c.l.b16 %v159
    %v384 = vunpack.c.l.b16 %v160
    %v385 = vunpack.c.l.b16 %v161
    %v386 = vunpack.c.l.b16 %v162
    %v387 = vunpack.c.l.b16 %v163
    %v388 = vunpack.c.l.b16 %v164
    %v389 = vunpack.c.l.b16 %v165
    %v390 = vunpack.c.l.b16 %v166
    %v391 = vunpack.c.l.b16 %v167
    %v392 = vunpack.c.l.b16 %v168
    %v393 = vunpack.c.l.b16 %v169
    %v394 = vunpack.c.l.b16 %v170
    %v395 = vunpack.c.l.b16 %v171
    %v396 = vpack.c.b16 %v301, %v300
    %v397 = vpack.c.b16 %v303, %v302
    %v398 = vpack.c.b16 %v305, %v304
    %v399 = vpack.c.b16 %v307, %v306
    %v400 = vpack.c.b16 %v309, %v308
    %v401 = vpack.c.b16 %v311, %v310
    %v402 = vpack.c.b16 %v313, %v312
    %v403 = vpack.c.b16 %v315, %v314
    %v404 = vpack.c.b16 %v317, %v316
    %v405 = vpack.c.b16 %v319, %v318
    %v406 = vpack.c.b16 %v321, %v320
    %v407 = vpack.c.b16 %v323, %v322
    %v408 = vpack.c.b16 %v325, %v324
    %v409 = vpack.c.b16 %v327, %v326
    %v410 = vpack.c.b16 %v329, %v328
    %v411 = vpack.c.b16 %v331, %v330
    %v412 = vpack.c.b16 %v333, %v332
    %v413 = vpack.c.b16 %v335, %v334
    %v414 = vpack.c.b16 %v337, %v336
    %v415 = vpack.c.b16 %v339, %v338
    %v416 = vpack.c.b16 %v341, %v340
    %v417 = vpack.c.b16 %v343, %v342
    %v418 = vpack.c.b16 %v345, %v344
    %v419 = vpack.c.b16 %v347, %v346
    %v420 = vpack.c.b16 %v349, %v348
    %v421 = vpack.c.b16 %v351, %v350
    %v422 = vpack.c.b16 %v353, %v352
    %v423 = vpack.c.b16 %v355, %v354
    %v424 = vpack.c.b16 %v357, %v356
    %v425 = vpack.c.b16 %v359, %v358
    %v426 = vpack.c.b16 %v361, %v360
    %v427 = vpack.c.b16 %v363, %v362
    %v428 = vpack.c.b16 %v365, %v364
    %v429 = vpack.c.b16 %v367, %v366
    %v430 = vpack.c.b16 %v369, %v368
    %v431 = vpack.c.b16 %v371, %v370
    %v432 = vpack.c.b16 %v373, %v372
    %v433 = vpack.c.b16 %v375, %v374
    %v434 = vpack.c.b16 %v377, %v376
    %v435 = vpack.c.b16 %v379, %v378
    %v436 = vpack.c.b16 %v381, %v380
    %v437 = vpack.c.b16 %v383, %v382
    %v438 = vpack.c.b16 %v385, %v384
    %v439 = vpack.c.b16 %v387, %v386
    %v440 = vpack.c.b16 %v389, %v388
    %v441 = vpack.c.b16 %v391, %v390
    %v442 = vpack.c.b16 %v393, %v392
    %v443 = vpack.c.b16 %v395, %v394
    %492 = vmatprep.subr.bf16.mxu0 0
    %493 = vmatpush1.bf16.msra.mxu0 %v403
    %494 = vmatprep.subr.bf16.mxu0 0
    %495 = vmatpush1.bf16.msra.mxu0 %v402
    %496 = vmatprep.subr.bf16.mxu0 0
    %497 = vmatpush1.bf16.msra.mxu0 %v401
    %498 = vmatprep.subr.bf16.mxu0 0
    %499 = vmatpush1.bf16.msra.mxu0 %v400
    %500 = vmatprep.subr.bf16.mxu0 0
    %501 = vmatpush1.bf16.msra.mxu0 %v399
    %502 = vmatprep.subr.bf16.mxu0 0
    %503 = vmatpush1.bf16.msra.mxu0 %v398
    %504 = vmatprep.subr.bf16.mxu0 0
    %505 = vmatpush1.bf16.msra.mxu0 %v397
    %506 = vmatprep.subr.bf16.mxu0 0
    %507 = vmatpush1.bf16.msra.mxu0 %v396
    %508 = vmatprep.subr.bf16.mxu0 0
    %509 = vmatpush2.bf16.msra.mxu0 %v411
    %510 = vmatprep.subr.bf16.mxu0 0
    %511 = vmatpush2.bf16.msra.mxu0 %v410
    %512 = vmatprep.subr.bf16.mxu0 0
    %513 = vmatpush2.bf16.msra.mxu0 %v409
    %514 = vmatprep.subr.bf16.mxu0 0
    %515 = vmatpush2.bf16.msra.mxu0 %v408
    %516 = vmatprep.subr.bf16.mxu0 0
    %517 = vmatpush2.bf16.msra.mxu0 %v407
    %518 = vmatprep.subr.bf16.mxu0 0
    %519 = vmatpush2.bf16.msra.mxu0 %v406
    %520 = vmatprep.subr.bf16.mxu0 0
    %521 = vmatpush2.bf16.msra.mxu0 %v405
    %522 = vmatprep.subr.bf16.mxu0 0
    %523 = vmatpush2.bf16.msra.mxu0 %v404
    %524 = vmatprep.mubr.bf16.mxu0 %v193
    %525 = vmatmul.mubr.bf16.gmra.mxu0 %v192
    %v526 = vpop.f32.mrf.mxu0
    %v527 = vadd.f32 %v172, %v526
    %v528 = vpop.f32.mrf.mxu0
    %v529 = vpop.f32.mrf.mxu0
    %v530 = vadd.f32 %v173, %v529
    %v531 = vpop.f32.mrf.mxu0
    %532 = vdwg.mxu0
    %533 = vmatprep.subr.bf16.mxu0 0
    %534 = vmatpush1.bf16.msra.mxu0 %v419
    %535 = vmatprep.subr.bf16.mxu0 0
    %536 = vmatpush1.bf16.msra.mxu0 %v418
    %537 = vmatprep.subr.bf16.mxu0 0
    %538 = vmatpush1.bf16.msra.mxu0 %v417
    %539 = vmatprep.subr.bf16.mxu0 0
    %540 = vmatpush1.bf16.msra.mxu0 %v416
    %541 = vmatprep.subr.bf16.mxu0 0
    %542 = vmatpush1.bf16.msra.mxu0 %v415
    %543 = vmatprep.subr.bf16.mxu0 0
    %544 = vmatpush1.bf16.msra.mxu0 %v414
    %545 = vmatprep.subr.bf16.mxu0 0
    %546 = vmatpush1.bf16.msra.mxu0 %v413
    %547 = vmatprep.subr.bf16.mxu0 0
    %548 = vmatpush1.bf16.msra.mxu0 %v412
    %549 = vmatprep.subr.bf16.mxu0 0
    %550 = vmatpush2.bf16.msra.mxu0 %v427
    %551 = vmatprep.subr.bf16.mxu0 0
    %552 = vmatpush2.bf16.msra.mxu0 %v426
    %553 = vmatprep.subr.bf16.mxu0 0
    %554 = vmatpush2.bf16.msra.mxu0 %v425
    %555 = vmatprep.subr.bf16.mxu0 0
    %556 = vmatpush2.bf16.msra.mxu0 %v424
    %557 = vmatprep.subr.bf16.mxu0 0
    %558 = vmatpush2.bf16.msra.mxu0 %v423
    %559 = vmatprep.subr.bf16.mxu0 0
    %560 = vmatpush2.bf16.msra.mxu0 %v422
    %561 = vmatprep.subr.bf16.mxu0 0
    %562 = vmatpush2.bf16.msra.mxu0 %v421
    %563 = vmatprep.subr.bf16.mxu0 0
    %564 = vmatpush2.bf16.msra.mxu0 %v420
    %565 = vmatprep.mubr.bf16.mxu0 %v195
    %566 = vmatmul.mubr.bf16.gmra.mxu0 %v194
    %v567 = vpop.f32.mrf.mxu0
    %v568 = vadd.f32 %v527, %v567
    %v569 = vpop.f32.mrf.mxu0
    %v570 = vpop.f32.mrf.mxu0
    %v571 = vadd.f32 %v530, %v570
    %v572 = vpop.f32.mrf.mxu0
    %573 = vdwg.mxu0
    %574 = vmatprep.subr.bf16.mxu0 0
    %575 = vmatpush1.bf16.msra.mxu0 %v435
    %576 = vmatprep.subr.bf16.mxu0 0
    %577 = vmatpush1.bf16.msra.mxu0 %v434
    %578 = vmatprep.subr.bf16.mxu0 0
    %579 = vmatpush1.bf16.msra.mxu0 %v433
    %580 = vmatprep.subr.bf16.mxu0 0
    %581 = vmatpush1.bf16.msra.mxu0 %v432
    %582 = vmatprep.subr.bf16.mxu0 0
    %583 = vmatpush1.bf16.msra.mxu0 %v431
    %584 = vmatprep.subr.bf16.mxu0 0
    %585 = vmatpush1.bf16.msra.mxu0 %v430
    %586 = vmatprep.subr.bf16.mxu0 0
    %587 = vmatpush1.bf16.msra.mxu0 %v429
    %588 = vmatprep.subr.bf16.mxu0 0
    %589 = vmatpush1.bf16.msra.mxu0 %v428
    %590 = vmatprep.subr.bf16.mxu0 0
    %591 = vmatpush2.bf16.msra.mxu0 %v443
    %592 = vmatprep.subr.bf16.mxu0 0
    %593 = vmatpush2.bf16.msra.mxu0 %v442
    %594 = vmatprep.subr.bf16.mxu0 0
    %595 = vmatpush2.bf16.msra.mxu0 %v441
    %596 = vmatprep.subr.bf16.mxu0 0
    %597 = vmatpush2.bf16.msra.mxu0 %v440
    %598 = vmatprep.subr.bf16.mxu0 0
    %599 = vmatpush2.bf16.msra.mxu0 %v439
    %600 = vmatprep.subr.bf16.mxu0 0
    %601 = vmatpush2.bf16.msra.mxu0 %v438
    %602 = vmatprep.subr.bf16.mxu0 0
    %603 = vmatpush2.bf16.msra.mxu0 %v437
    %604 = vmatprep.subr.bf16.mxu0 0
    %605 = vmatpush2.bf16.msra.mxu0 %v436
    %606 = vmatprep.mubr.bf16.mxu0 %v197
    %607 = vmatmul.mubr.bf16.gmra.mxu0 %v196
    %v608 = vpop.f32.mrf.mxu0
    %v609 = vadd.f32 %v568, %v608
    %v610 = vpop.f32.mrf.mxu0
    %v611 = vpop.f32.mrf.mxu0
    %v612 = vadd.f32 %v571, %v611
    %v613 = vpop.f32.mrf.mxu0
    %614 = vdwg.mxu0
    %v615 = vld [vmem:[%s3] sm:$0xff]
    %v616 = vld [vmem:[%s3 + $0x8] sm:$0xff]
    %v617 = vld [vmem:[%s3 + $0x10] sm:$0xff]
    %v618 = vld [vmem:[%s3 + $0x18] sm:$0xff]
    %v619 = vld [vmem:[%s4] sm:$0xff]
    %v620 = vld [vmem:[%s5] sm:$0x1]
    %v621 = vld [vmem:[%s6] sm:$0x1]
    %vm622 = vcmask 261120
    %v623 = vsel %vm622, %v609, 0.0
    %624 = vadd.xlane.f32.xlu0 %v623
    %v625 = vpop.xlane.xlu0 %624
    %v626 = vsel %vm622, %v612, 0.0
    %627 = vadd.xlane.f32.xlu0 %v626
    %v628 = vpop.xlane.xlu0 %627
    %v629 = vrcp.pop 32.0
    %v630 = vmul.f32 %v625, %v629
    %v631 = vmul.f32 %v628, %v629
    %v632 = vsub.f32 %v609, %v630
    %v633 = vsub.f32 %v612, %v631
    %v634 = vmul.f32 %v632, %v632
    %v635 = vmul.f32 %v633, %v633
    %v636 = vsel %vm622, %v634, 0.0
    %637 = vadd.xlane.f32.xlu0 %v636
    %v638 = vpop.xlane.xlu0 %637
    %v639 = vsel %vm622, %v635, 0.0
    %640 = vadd.xlane.f32.xlu0 %v639
    %v641 = vpop.xlane.xlu0 %640
    %v642 = vmul.f32 %v638, %v629
    %v643 = vmul.f32 %v641, %v629
    %v644 = vadd.f32 %v642, 1e-06
    %v645 = vadd.f32 %v643, 1e-06
    %v646 = vrsqrt.pop %v644
    %v647 = vrsqrt.pop %v645
    %v648 = vmul.f32 %v632, %v646
    %v649 = vmul.f32 %v633, %v647
    %v651 = vlaneseq
    %v652 = vshrl.u32 %v651, 7
    %v653 = vsub.s32 0, %v652
    %v654 = vrot.slane %v620, %v653
    %v656 = vmul.f32 %v648, %v654
    %v657 = vmul.f32 %v649, %v654
    %v659 = vlaneseq
    %v660 = vshrl.u32 %v659, 7
    %v661 = vsub.s32 0, %v660
    %v662 = vrot.slane %v621, %v661
    %v664 = vadd.f32 %v656, %v662
    %v665 = vadd.f32 %v657, %v662
    %v666 = vpack.c.bf16 %v665, %v664
    %v667 = vld [vmem:[%s7] sm:$0xf]
    %v668 = vld [vmem:[%s7 + $0x4] sm:$0xf]
    %v669 = vld [vmem:[%s7 + $0x8] sm:$0xf]
    %v670 = vld [vmem:[%s7 + $0xc] sm:$0xf]
    %v671 = vld [vmem:[%s8] sm:$0x1]
    %v673 = vlaneseq
    %v674 = vshrl.u32 %v673, 7
    %v675 = vsub.s32 0, %v674
    %v676 = vrot.slane %v671, %v675
    %v682 = vunpack.c.l.b16 %v667
    %v683 = vunpack.c.l.b16 %v668
    %v684 = vunpack.c.l.b16 %v669
    %v685 = vunpack.c.l.b16 %v670
    %v686 = vpack.c.b16 %v683, %v682
    %v687 = vpack.c.b16 %v685, %v684
    %v691 = vsel %vm622, %v666, 0
    %693 = vmatprep.subr.bf16.mxu0 0
    %694 = vmatpush1.bf16.msra.mxu0 0
    %695 = vmatprep.subr.bf16.mxu0 0
    %696 = vmatpush1.bf16.msra.mxu0 0
    %697 = vmatprep.subr.bf16.mxu0 0
    %698 = vmatpush1.bf16.msra.mxu0 0
    %699 = vmatprep.subr.bf16.mxu0 0
    %700 = vmatpush1.bf16.msra.mxu0 0
    %701 = vmatprep.subr.bf16.mxu0 0
    %702 = vmatpush1.bf16.msra.mxu0 0
    %703 = vmatprep.subr.bf16.mxu0 0
    %704 = vmatpush1.bf16.msra.mxu0 0
    %705 = vmatprep.subr.bf16.mxu0 0
    %706 = vmatpush1.bf16.msra.mxu0 %v687
    %707 = vmatprep.subr.bf16.mxu0 0
    %708 = vmatpush1.bf16.msra.mxu0 %v686
    %709 = vmatprep.subr.bf16.mxu0 0
    %710 = vmatpush2.bf16.msra.mxu0 0
    %711 = vmatprep.subr.bf16.mxu0 0
    %712 = vmatpush2.bf16.msra.mxu0 0
    %713 = vmatprep.subr.bf16.mxu0 0
    %714 = vmatpush2.bf16.msra.mxu0 0
    %715 = vmatprep.subr.bf16.mxu0 0
    %716 = vmatpush2.bf16.msra.mxu0 0
    %717 = vmatprep.subr.bf16.mxu0 0
    %718 = vmatpush2.bf16.msra.mxu0 0
    %719 = vmatprep.subr.bf16.mxu0 0
    %720 = vmatpush2.bf16.msra.mxu0 0
    %721 = vmatprep.subr.bf16.mxu0 0
    %722 = vmatpush2.bf16.msra.mxu0 0
    %723 = vmatprep.subr.bf16.mxu0 0
    %724 = vmatpush2.bf16.msra.mxu0 0
    %725 = vmatprep.mubr.bf16.mxu0 0
    %726 = vmatmul.mubr.bf16.gmra.mxu0 %v691
    %v727 = vpop.f32.mrf.mxu0
    %v728 = vadd.f32 %v676, %v727
    %v729 = vpop.f32.mrf.mxu0
    %v730 = vpop.f32.mrf.mxu0
    %v731 = vadd.f32 %v676, %v730
    %v732 = vpop.f32.mrf.mxu0
    %733 = vdwg.mxu0
    %738 = vrot.lane.b32.xlu0 %v615, 32
    %v739 = vpop.permute.xlu0 %738
    %740 = vrot.lane.b32.xlu0 %v616, 32
    %v741 = vpop.permute.xlu0 %740
    %742 = vrot.lane.b32.xlu0 %v617, 32
    %v743 = vpop.permute.xlu0 %742
    %744 = vrot.lane.b32.xlu0 %v618, 32
    %v745 = vpop.permute.xlu0 %744
    %v750 = vmul.f32 %v728, %v739
    %v751 = vmul.f32 %v728, %v741
    %v752 = vmul.f32 %v728, %v743
    %v753 = vmul.f32 %v728, %v745
    %v754 = vmul.f32 %v731, %v739
    %v755 = vmul.f32 %v731, %v741
    %v756 = vmul.f32 %v731, %v743
    %v757 = vmul.f32 %v731, %v745
    %v758 = vpack.c.bf16 %v751, %v750
    %v759 = vpack.c.bf16 %v753, %v752
    %v760 = vpack.c.bf16 %v755, %v754
    %v761 = vpack.c.bf16 %v757, %v756
    %762 = vrot.lane.b32.xlu0 %v615, 64
    %v763 = vpop.permute.xlu0 %762
    %764 = vrot.lane.b32.xlu0 %v616, 64
    %v765 = vpop.permute.xlu0 %764
    %766 = vrot.lane.b32.xlu0 %v617, 64
    %v767 = vpop.permute.xlu0 %766
    %768 = vrot.lane.b32.xlu0 %v618, 64
    %v769 = vpop.permute.xlu0 %768
    %v774 = vmul.f32 %v728, %v763
    %v775 = vmul.f32 %v728, %v765
    %v776 = vmul.f32 %v728, %v767
    %v777 = vmul.f32 %v728, %v769
    %v778 = vmul.f32 %v731, %v763
    %v779 = vmul.f32 %v731, %v765
    %v780 = vmul.f32 %v731, %v767
    %v781 = vmul.f32 %v731, %v769
    %v782 = vpack.c.bf16 %v775, %v774
    %v783 = vpack.c.bf16 %v777, %v776
    %v784 = vpack.c.bf16 %v779, %v778
    %v785 = vpack.c.bf16 %v781, %v780
    %v786 = vpack.c.bf16 %v728, %v728
    %v787 = vpack.c.bf16 %v731, %v731
    %790 = vrot.lane.b32.xlu0 %v758, 96
    %v791 = vpop.permute.xlu0 %790
    %792 = vrot.lane.b32.xlu0 %v759, 96
    %v793 = vpop.permute.xlu0 %792
    %v795 = vsel %vm622, %v786, 0
    %v798 = vsel %vm622, %v791, 0
    %v801 = vsel %vm622, %v793, 0
    %803 = vmatprep.subr.bf16.mxu0 0
    %804 = vmatpush1.bf16.xpose.msra.mxu0 0
    %805 = vmatprep.subr.bf16.mxu0 0
    %806 = vmatpush1.bf16.xpose.msra.mxu0 0
    %807 = vmatprep.subr.bf16.mxu0 0
    %808 = vmatpush1.bf16.xpose.msra.mxu0 0
    %809 = vmatprep.subr.bf16.mxu0 0
    %810 = vmatpush1.bf16.xpose.msra.mxu0 0
    %811 = vmatprep.subr.bf16.mxu0 0
    %812 = vmatpush1.bf16.xpose.msra.mxu0 0
    %813 = vmatprep.subr.bf16.mxu0 0
    %814 = vmatpush1.bf16.xpose.msra.mxu0 0
    %815 = vmatprep.subr.bf16.mxu0 0
    %816 = vmatpush1.bf16.xpose.msra.mxu0 %v801
    %817 = vmatprep.subr.bf16.mxu0 0
    %818 = vmatpush1.bf16.xpose.msra.mxu0 %v798
    %819 = vmatprep.subr.bf16.mxu0 0
    %820 = vmatpush2.bf16.xpose.msra.mxu0 0
    %821 = vmatprep.subr.bf16.mxu0 0
    %822 = vmatpush2.bf16.xpose.msra.mxu0 0
    %823 = vmatprep.subr.bf16.mxu0 0
    %824 = vmatpush2.bf16.xpose.msra.mxu0 0
    %825 = vmatprep.subr.bf16.mxu0 0
    %826 = vmatpush2.bf16.xpose.msra.mxu0 0
    %827 = vmatprep.subr.bf16.mxu0 0
    %828 = vmatpush2.bf16.xpose.msra.mxu0 0
    %829 = vmatprep.subr.bf16.mxu0 0
    %830 = vmatpush2.bf16.xpose.msra.mxu0 0
    %831 = vmatprep.subr.bf16.mxu0 0
    %832 = vmatpush2.bf16.xpose.msra.mxu0 0
    %833 = vmatprep.subr.bf16.mxu0 0
    %834 = vmatpush2.bf16.xpose.msra.mxu0 0
    %835 = vmatprep.mubr.bf16.mxu0 0
    %836 = vmatmul.mubr.bf16.gmra.mxu0 %v795
    %v837 = vpop.f32.mrf.mxu0
    %v838 = vadd.f32 %v619, %v837
    %v839 = vpop.f32.mrf.mxu0
    %v840 = vpop.f32.mrf.mxu0
    %v841 = vpop.f32.mrf.mxu0
    %842 = vdwg.mxu0
    %845 = vrot.lane.b32.xlu0 %v760, 96
    %v846 = vpop.permute.xlu0 %845
    %847 = vrot.lane.b32.xlu0 %v761, 96
    %v848 = vpop.permute.xlu0 %847
    %v850 = vsel %vm622, %v787, 0
    %v853 = vsel %vm622, %v846, 0
    %v856 = vsel %vm622, %v848, 0
    %858 = vmatprep.subr.bf16.mxu0 0
    %859 = vmatpush1.bf16.xpose.msra.mxu0 0
    %860 = vmatprep.subr.bf16.mxu0 0
    %861 = vmatpush1.bf16.xpose.msra.mxu0 0
    %862 = vmatprep.subr.bf16.mxu0 0
    %863 = vmatpush1.bf16.xpose.msra.mxu0 0
    %864 = vmatprep.subr.bf16.mxu0 0
    %865 = vmatpush1.bf16.xpose.msra.mxu0 0
    %866 = vmatprep.subr.bf16.mxu0 0
    %867 = vmatpush1.bf16.xpose.msra.mxu0 0
    %868 = vmatprep.subr.bf16.mxu0 0
    %869 = vmatpush1.bf16.xpose.msra.mxu0 0
    %870 = vmatprep.subr.bf16.mxu0 0
    %871 = vmatpush1.bf16.xpose.msra.mxu0 %v856
    %872 = vmatprep.subr.bf16.mxu0 0
    %873 = vmatpush1.bf16.xpose.msra.mxu0 %v853
    %874 = vmatprep.subr.bf16.mxu0 0
    %875 = vmatpush2.bf16.xpose.msra.mxu0 0
    %876 = vmatprep.subr.bf16.mxu0 0
    %877 = vmatpush2.bf16.xpose.msra.mxu0 0
    %878 = vmatprep.subr.bf16.mxu0 0
    %879 = vmatpush2.bf16.xpose.msra.mxu0 0
    %880 = vmatprep.subr.bf16.mxu0 0
    %881 = vmatpush2.bf16.xpose.msra.mxu0 0
    %882 = vmatprep.subr.bf16.mxu0 0
    %883 = vmatpush2.bf16.xpose.msra.mxu0 0
    %884 = vmatprep.subr.bf16.mxu0 0
    %885 = vmatpush2.bf16.xpose.msra.mxu0 0
    %886 = vmatprep.subr.bf16.mxu0 0
    %887 = vmatpush2.bf16.xpose.msra.mxu0 0
    %888 = vmatprep.subr.bf16.mxu0 0
    %889 = vmatpush2.bf16.xpose.msra.mxu0 0
    %890 = vmatprep.mubr.bf16.mxu0 0
    %891 = vmatmul.mubr.bf16.gmra.mxu0 %v850
    %v892 = vpop.f32.mrf.mxu0
    %v893 = vadd.f32 %v619, %v892
    %v894 = vpop.f32.mrf.mxu0
    %v895 = vpop.f32.mrf.mxu0
    %v896 = vpop.f32.mrf.mxu0
    %897 = vdwg.mxu0
    %v898 = vsel %vm622, %v838, -inf
    %899 = vmax.xlane.f32.xlu0 %v898
    %v900 = vpop.xlane.xlu0 %899
    %v901 = vsel %vm622, %v893, -inf
    %902 = vmax.xlane.f32.xlu0 %v901
    %v903 = vpop.xlane.xlu0 %902
    %v904 = vsub.f32 %v838, %v900
    %v905 = vsub.f32 %v893, %v903
    %v906 = vmul.f32 %v904, 1.442695
    %v907 = vpow.pop %v906
    %v908 = vmul.f32 %v905, 1.442695
    %v909 = vpow.pop %v908
    %v910 = vpack.c.bf16 %v907, %v907
    %v911 = vpack.c.bf16 %v909, %v909
    %914 = vrot.lane.b32.xlu0 %v782, 64
    %v915 = vpop.permute.xlu0 %914
    %916 = vrot.lane.b32.xlu0 %v783, 64
    %v917 = vpop.permute.xlu0 %916
    %v921 = vsel %vm622, %v910, 0
    %923 = vmatprep.subr.bf16.mxu0 0
    %924 = vmatpush1.bf16.msra.mxu0 0
    %925 = vmatprep.subr.bf16.mxu0 0
    %926 = vmatpush1.bf16.msra.mxu0 0
    %927 = vmatprep.subr.bf16.mxu0 0
    %928 = vmatpush1.bf16.msra.mxu0 0
    %929 = vmatprep.subr.bf16.mxu0 0
    %930 = vmatpush1.bf16.msra.mxu0 0
    %931 = vmatprep.subr.bf16.mxu0 0
    %932 = vmatpush1.bf16.msra.mxu0 0
    %933 = vmatprep.subr.bf16.mxu0 0
    %934 = vmatpush1.bf16.msra.mxu0 0
    %935 = vmatprep.subr.bf16.mxu0 0
    %936 = vmatpush1.bf16.msra.mxu0 %v917
    %937 = vmatprep.subr.bf16.mxu0 0
    %938 = vmatpush1.bf16.msra.mxu0 %v915
    %939 = vmatprep.subr.bf16.mxu0 0
    %940 = vmatpush2.bf16.msra.mxu0 0
    %941 = vmatprep.subr.bf16.mxu0 0
    %942 = vmatpush2.bf16.msra.mxu0 0
    %943 = vmatprep.subr.bf16.mxu0 0
    %944 = vmatpush2.bf16.msra.mxu0 0
    %945 = vmatprep.subr.bf16.mxu0 0
    %946 = vmatpush2.bf16.msra.mxu0 0
    %947 = vmatprep.subr.bf16.mxu0 0
    %948 = vmatpush2.bf16.msra.mxu0 0
    %949 = vmatprep.subr.bf16.mxu0 0
    %950 = vmatpush2.bf16.msra.mxu0 0
    %951 = vmatprep.subr.bf16.mxu0 0
    %952 = vmatpush2.bf16.msra.mxu0 0
    %953 = vmatprep.subr.bf16.mxu0 0
    %954 = vmatpush2.bf16.msra.mxu0 0
    %955 = vmatprep.mubr.bf16.mxu0 0
    %956 = vmatmul.mubr.bf16.gmra.mxu0 %v921
    %v957 = vpop.f32.mrf.mxu0
    %v958 = vadd.f32 0.0, %v957
    %v959 = vpop.f32.mrf.mxu0
    %v960 = vpop.f32.mrf.mxu0
    %v961 = vpop.f32.mrf.mxu0
    %962 = vdwg.mxu0
    %965 = vrot.lane.b32.xlu0 %v784, 64
    %v966 = vpop.permute.xlu0 %965
    %967 = vrot.lane.b32.xlu0 %v785, 64
    %v968 = vpop.permute.xlu0 %967
    %v972 = vsel %vm622, %v911, 0
    %974 = vmatprep.subr.bf16.mxu0 0
    %975 = vmatpush1.bf16.msra.mxu0 0
    %976 = vmatprep.subr.bf16.mxu0 0
    %977 = vmatpush1.bf16.msra.mxu0 0
    %978 = vmatprep.subr.bf16.mxu0 0
    %979 = vmatpush1.bf16.msra.mxu0 0
    %980 = vmatprep.subr.bf16.mxu0 0
    %981 = vmatpush1.bf16.msra.mxu0 0
    %982 = vmatprep.subr.bf16.mxu0 0
    %983 = vmatpush1.bf16.msra.mxu0 0
    %984 = vmatprep.subr.bf16.mxu0 0
    %985 = vmatpush1.bf16.msra.mxu0 0
    %986 = vmatprep.subr.bf16.mxu0 0
    %987 = vmatpush1.bf16.msra.mxu0 %v968
    %988 = vmatprep.subr.bf16.mxu0 0
    %989 = vmatpush1.bf16.msra.mxu0 %v966
    %990 = vmatprep.subr.bf16.mxu0 0
    %991 = vmatpush2.bf16.msra.mxu0 0
    %992 = vmatprep.subr.bf16.mxu0 0
    %993 = vmatpush2.bf16.msra.mxu0 0
    %994 = vmatprep.subr.bf16.mxu0 0
    %995 = vmatpush2.bf16.msra.mxu0 0
    %996 = vmatprep.subr.bf16.mxu0 0
    %997 = vmatpush2.bf16.msra.mxu0 0
    %998 = vmatprep.subr.bf16.mxu0 0
    %999 = vmatpush2.bf16.msra.mxu0 0
    %1000 = vmatprep.subr.bf16.mxu0 0
    %1001 = vmatpush2.bf16.msra.mxu0 0
    %1002 = vmatprep.subr.bf16.mxu0 0
    %1003 = vmatpush2.bf16.msra.mxu0 0
    %1004 = vmatprep.subr.bf16.mxu0 0
    %1005 = vmatpush2.bf16.msra.mxu0 0
    %1006 = vmatprep.mubr.bf16.mxu0 0
    %1007 = vmatmul.mubr.bf16.gmra.mxu0 %v972
    %v1008 = vpop.f32.mrf.mxu0
    %v1009 = vadd.f32 0.0, %v1008
    %v1010 = vpop.f32.mrf.mxu0
    %v1011 = vpop.f32.mrf.mxu0
    %v1012 = vpop.f32.mrf.mxu0
    %1013 = vdwg.mxu0
    %v1015 = vsel %vm622, %v907, 0
    %v1018 = vsel %vm622, %v909, 0
    %1020 = vmatprep.subr.mxu0 0.0
    %1021 = vmatpush1.msra.mxu0 0.0
    %1022 = vmatprep.subr.mxu0 0.0
    %1023 = vmatpush1.msra.mxu0 0.0
    %1024 = vmatprep.subr.mxu0 0.0
    %1025 = vmatpush1.msra.mxu0 0.0
    %1026 = vmatprep.subr.mxu0 0.0
    %1027 = vmatpush1.msra.mxu0 0.0
    %1028 = vmatprep.subr.mxu0 0.0
    %1029 = vmatpush1.msra.mxu0 0.0
    %1030 = vmatprep.subr.mxu0 0.0
    %1031 = vmatpush1.msra.mxu0 0.0
    %1032 = vmatprep.subr.mxu0 0.0
    %1033 = vmatpush1.msra.mxu0 0.0
    %1034 = vmatprep.subr.mxu0 0.0
    %1035 = vmatpush1.msra.mxu0 0.0
    %1036 = vmatprep.subr.mxu0 0.0
    %1037 = vmatpush1.msra.mxu0 0.0
    %1038 = vmatprep.subr.mxu0 0.0
    %1039 = vmatpush1.msra.mxu0 0.0
    %1040 = vmatprep.subr.mxu0 0.0
    %1041 = vmatpush1.msra.mxu0 0.0
    %1042 = vmatprep.subr.mxu0 0.0
    %1043 = vmatpush1.msra.mxu0 0.0
    %1044 = vmatprep.subr.mxu0 0.0
    %1045 = vmatpush1.msra.mxu0 %v618
    %1046 = vmatprep.subr.mxu0 0.0
    %1047 = vmatpush1.msra.mxu0 %v617
    %1048 = vmatprep.subr.mxu0 0.0
    %1049 = vmatpush1.msra.mxu0 %v616
    %1050 = vmatprep.subr.mxu0 0.0
    %1051 = vmatpush1.msra.mxu0 %v615
    %1052 = vmatprep.subr.mxu0 0.0
    %1053 = vmatpush2.msra.mxu0 0.0
    %1054 = vmatprep.subr.mxu0 0.0
    %1055 = vmatpush2.msra.mxu0 0.0
    %1056 = vmatprep.subr.mxu0 0.0
    %1057 = vmatpush2.msra.mxu0 0.0
    %1058 = vmatprep.subr.mxu0 0.0
    %1059 = vmatpush2.msra.mxu0 0.0
    %1060 = vmatprep.subr.mxu0 0.0
    %1061 = vmatpush2.msra.mxu0 0.0
    %1062 = vmatprep.subr.mxu0 0.0
    %1063 = vmatpush2.msra.mxu0 0.0
    %1064 = vmatprep.subr.mxu0 0.0
    %1065 = vmatpush2.msra.mxu0 0.0
    %1066 = vmatprep.subr.mxu0 0.0
    %1067 = vmatpush2.msra.mxu0 0.0
    %1068 = vmatprep.subr.mxu0 0.0
    %1069 = vmatpush2.msra.mxu0 0.0
    %1070 = vmatprep.subr.mxu0 0.0
    %1071 = vmatpush2.msra.mxu0 0.0
    %1072 = vmatprep.subr.mxu0 0.0
    %1073 = vmatpush2.msra.mxu0 0.0
    %1074 = vmatprep.subr.mxu0 0.0
    %1075 = vmatpush2.msra.mxu0 0.0
    %1076 = vmatprep.subr.mxu0 0.0
    %1077 = vmatpush2.msra.mxu0 0.0
    %1078 = vmatprep.subr.mxu0 0.0
    %1079 = vmatpush2.msra.mxu0 0.0
    %1080 = vmatprep.subr.mxu0 0.0
    %1081 = vmatpush2.msra.mxu0 0.0
    %1082 = vmatprep.subr.mxu0 0.0
    %1083 = vmatpush2.msra.mxu0 0.0
    %1084 = vmatprep.mubr.f32.mxu0 0.0
    %1085 = vmatmul.mubr.f32.gmra.mxu0 %v1015
    %v1086 = vpop.f32.mrf.mxu0
    %v1087 = vadd.f32 0.0, %v1086
    %v1088 = vpop.f32.mrf.mxu0
    %1089 = vmatprep.mubr.f32.mxu0 0.0
    %1090 = vmatmul.mubr.f32.gmra.mxu0 %v1018
    %v1091 = vpop.f32.mrf.mxu0
    %v1092 = vadd.f32 0.0, %v1091
    %v1093 = vpop.f32.mrf.mxu0
    %1094 = vdwg.mxu0
    %v1095 = vrcp.pop %v1087
    %v1096 = vrcp.pop %v1092
    %v1097 = vmul.f32 %v958, %v1095
    %v1098 = vmul.f32 %v1009, %v1096
    %v1099 = vpack.c.bf16 %v1098, %v1097
    %v1100 = vld [vmem:[%s9] sm:$0xf]
    %v1101 = vld [vmem:[%s9 + $0x4] sm:$0xf]
    %v1102 = vld [vmem:[%s9 + $0x8] sm:$0xf]
    %v1103 = vld [vmem:[%s9 + $0xc] sm:$0xf]
    %v1104 = vld [vmem:[%s10] sm:$0x1]
    %v1106 = vlaneseq
    %v1107 = vshrl.u32 %v1106, 7
    %v1108 = vsub.s32 0, %v1107
    %v1109 = vrot.slane %v1104, %v1108
    %v1115 = vunpack.c.l.b16 %v1100
    %v1116 = vunpack.c.l.b16 %v1101
    %v1117 = vunpack.c.l.b16 %v1102
    %v1118 = vunpack.c.l.b16 %v1103
    %v1119 = vpack.c.b16 %v1116, %v1115
    %v1120 = vpack.c.b16 %v1118, %v1117
    %v1124 = vsel %vm622, %v1099, 0
    %1126 = vmatprep.subr.bf16.mxu0 0
    %1127 = vmatpush1.bf16.msra.mxu0 0
    %1128 = vmatprep.subr.bf16.mxu0 0
    %1129 = vmatpush1.bf16.msra.mxu0 0
    %1130 = vmatprep.subr.bf16.mxu0 0
    %1131 = vmatpush1.bf16.msra.mxu0 0
    %1132 = vmatprep.subr.bf16.mxu0 0
    %1133 = vmatpush1.bf16.msra.mxu0 0
    %1134 = vmatprep.subr.bf16.mxu0 0
    %1135 = vmatpush1.bf16.msra.mxu0 0
    %1136 = vmatprep.subr.bf16.mxu0 0
    %1137 = vmatpush1.bf16.msra.mxu0 0
    %1138 = vmatprep.subr.bf16.mxu0 0
    %1139 = vmatpush1.bf16.msra.mxu0 %v1120
    %1140 = vmatprep.subr.bf16.mxu0 0
    %1141 = vmatpush1.bf16.msra.mxu0 %v1119
    %1142 = vmatprep.subr.bf16.mxu0 0
    %1143 = vmatpush2.bf16.msra.mxu0 0
    %1144 = vmatprep.subr.bf16.mxu0 0
    %1145 = vmatpush2.bf16.msra.mxu0 0
    %1146 = vmatprep.subr.bf16.mxu0 0
    %1147 = vmatpush2.bf16.msra.mxu0 0
    %1148 = vmatprep.subr.bf16.mxu0 0
    %1149 = vmatpush2.bf16.msra.mxu0 0
    %1150 = vmatprep.subr.bf16.mxu0 0
    %1151 = vmatpush2.bf16.msra.mxu0 0
    %1152 = vmatprep.subr.bf16.mxu0 0
    %1153 = vmatpush2.bf16.msra.mxu0 0
    %1154 = vmatprep.subr.bf16.mxu0 0
    %1155 = vmatpush2.bf16.msra.mxu0 0
    %1156 = vmatprep.subr.bf16.mxu0 0
    %1157 = vmatpush2.bf16.msra.mxu0 0
    %1158 = vmatprep.mubr.bf16.mxu0 0
    %1159 = vmatmul.mubr.bf16.gmra.mxu0 %v1124
    %v1160 = vpop.f32.mrf.mxu0
    %v1161 = vadd.f32 %v1109, %v1160
    %v1162 = vpop.f32.mrf.mxu0
    %v1163 = vpop.f32.mrf.mxu0
    %v1164 = vadd.f32 %v1109, %v1163
    %v1165 = vpop.f32.mrf.mxu0
    %1166 = vdwg.mxu0
    %v1167 = vadd.f32 %v609, %v1161
    %v1168 = vadd.f32 %v612, %v1164
    %v1169 = vld [vmem:[%s11] sm:$0x1]
    %v1170 = vld [vmem:[%s12] sm:$0x1]
    %v1171 = vsel %vm622, %v1167, 0.0
    %1172 = vadd.xlane.f32.xlu0 %v1171
    %v1173 = vpop.xlane.xlu0 %1172
    %v1174 = vsel %vm622, %v1168, 0.0
    %1175 = vadd.xlane.f32.xlu0 %v1174
    %v1176 = vpop.xlane.xlu0 %1175
    %v1177 = vmul.f32 %v1173, %v629
    %v1178 = vmul.f32 %v1176, %v629
    %v1179 = vsub.f32 %v1167, %v1177
    %v1180 = vsub.f32 %v1168, %v1178
    %v1181 = vmul.f32 %v1179, %v1179
    %v1182 = vmul.f32 %v1180, %v1180
    %v1183 = vsel %vm622, %v1181, 0.0
    %1184 = vadd.xlane.f32.xlu0 %v1183
    %v1185 = vpop.xlane.xlu0 %1184
    %v1186 = vsel %vm622, %v1182, 0.0
    %1187 = vadd.xlane.f32.xlu0 %v1186
    %v1188 = vpop.xlane.xlu0 %1187
    %v1189 = vmul.f32 %v1185, %v629
    %v1190 = vmul.f32 %v1188, %v629
    %v1191 = vadd.f32 %v1189, 1e-06
    %v1192 = vadd.f32 %v1190, 1e-06
    %v1193 = vrsqrt.pop %v1191
    %v1194 = vrsqrt.pop %v1192
    %v1195 = vmul.f32 %v1179, %v1193
    %v1196 = vmul.f32 %v1180, %v1194
    %v1198 = vlaneseq
    %v1199 = vshrl.u32 %v1198, 7
    %v1200 = vsub.s32 0, %v1199
    %v1201 = vrot.slane %v1169, %v1200
    %v1203 = vmul.f32 %v1195, %v1201
    %v1204 = vmul.f32 %v1196, %v1201
    %v1206 = vlaneseq
    %v1207 = vshrl.u32 %v1206, 7
    %v1208 = vsub.s32 0, %v1207
    %v1209 = vrot.slane %v1170, %v1208
    %v1211 = vadd.f32 %v1203, %v1209
    %v1212 = vadd.f32 %v1204, %v1209
    %v1213 = vpack.c.bf16 %v1212, %v1211
    %v1214 = vld [vmem:[%s13] sm:$0xf]
    %v1215 = vld [vmem:[%s13 + $0x4] sm:$0xf]
    %v1216 = vld [vmem:[%s13 + $0x8] sm:$0xf]
    %v1217 = vld [vmem:[%s13 + $0xc] sm:$0xf]
    %v1218 = vld [vmem:[%s14] sm:$0x1]
    %v1220 = vlaneseq
    %v1221 = vshrl.u32 %v1220, 7
    %v1222 = vsub.s32 0, %v1221
    %v1223 = vrot.slane %v1218, %v1222
    %v1229 = vunpack.c.l.b16 %v1214
    %v1230 = vunpack.c.l.b16 %v1215
    %v1231 = vunpack.c.l.b16 %v1216
    %v1232 = vunpack.c.l.b16 %v1217
    %v1233 = vpack.c.b16 %v1230, %v1229
    %v1234 = vpack.c.b16 %v1232, %v1231
    %v1238 = vsel %vm622, %v1213, 0
    %1240 = vmatprep.subr.bf16.mxu0 0
    %1241 = vmatpush1.bf16.msra.mxu0 0
    %1242 = vmatprep.subr.bf16.mxu0 0
    %1243 = vmatpush1.bf16.msra.mxu0 0
    %1244 = vmatprep.subr.bf16.mxu0 0
    %1245 = vmatpush1.bf16.msra.mxu0 0
    %1246 = vmatprep.subr.bf16.mxu0 0
    %1247 = vmatpush1.bf16.msra.mxu0 0
    %1248 = vmatprep.subr.bf16.mxu0 0
    %1249 = vmatpush1.bf16.msra.mxu0 0
    %1250 = vmatprep.subr.bf16.mxu0 0
    %1251 = vmatpush1.bf16.msra.mxu0 0
    %1252 = vmatprep.subr.bf16.mxu0 0
    %1253 = vmatpush1.bf16.msra.mxu0 %v1234
    %1254 = vmatprep.subr.bf16.mxu0 0
    %1255 = vmatpush1.bf16.msra.mxu0 %v1233
    %1256 = vmatprep.subr.bf16.mxu0 0
    %1257 = vmatpush2.bf16.msra.mxu0 0
    %1258 = vmatprep.subr.bf16.mxu0 0
    %1259 = vmatpush2.bf16.msra.mxu0 0
    %1260 = vmatprep.subr.bf16.mxu0 0
    %1261 = vmatpush2.bf16.msra.mxu0 0
    %1262 = vmatprep.subr.bf16.mxu0 0
    %1263 = vmatpush2.bf16.msra.mxu0 0
    %1264 = vmatprep.subr.bf16.mxu0 0
    %1265 = vmatpush2.bf16.msra.mxu0 0
    %1266 = vmatprep.subr.bf16.mxu0 0
    %1267 = vmatpush2.bf16.msra.mxu0 0
    %1268 = vmatprep.subr.bf16.mxu0 0
    %1269 = vmatpush2.bf16.msra.mxu0 0
    %1270 = vmatprep.subr.bf16.mxu0 0
    %1271 = vmatpush2.bf16.msra.mxu0 0
    %1272 = vmatprep.mubr.bf16.mxu0 0
    %1273 = vmatmul.mubr.bf16.gmra.mxu0 %v1238
    %v1274 = vpop.f32.mrf.mxu0
    %v1275 = vadd.f32 %v1223, %v1274
    %v1276 = vpop.f32.mrf.mxu0
    %v1277 = vpop.f32.mrf.mxu0
    %v1278 = vadd.f32 %v1223, %v1277
    %v1279 = vpop.f32.mrf.mxu0
    %1280 = vdwg.mxu0
    %v1281 = vmul.f32 %v1275, %v1275
    %v1282 = vmul.f32 %v1278, %v1278
    %v1283 = vmul.f32 %v1275, %v1281
    %v1284 = vmul.f32 %v1278, %v1282
    %v1285 = vmul.f32 %v1283, 0.044715
    %v1286 = vmul.f32 %v1284, 0.044715
    %v1287 = vadd.f32 %v1275, %v1285
    %v1288 = vadd.f32 %v1278, %v1286
    %v1289 = vmul.f32 %v1287, 0.7978846
    %v1290 = vmul.f32 %v1288, 0.7978846
    %v1291 = vtanh.pop %v1289
    %v1292 = vtanh.pop %v1290
    %v1293 = vadd.f32 %v1291, 1.0
    %v1294 = vadd.f32 %v1292, 1.0
    %v1295 = vmul.f32 %v1293, 0.5
    %v1296 = vmul.f32 %v1294, 0.5
    %v1297 = vmul.f32 %v1275, %v1295
    %v1298 = vmul.f32 %v1278, %v1296
    %v1299 = vpack.c.bf16 %v1298, %v1297
    %v1300 = vld [vmem:[%s15] sm:$0xf]
    %v1301 = vld [vmem:[%s15 + $0x4] sm:$0xf]
    %v1302 = vld [vmem:[%s15 + $0x8] sm:$0xf]
    %v1303 = vld [vmem:[%s15 + $0xc] sm:$0xf]
    %v1304 = vld [vmem:[%s15 + $0x10] sm:$0xf]
    %v1305 = vld [vmem:[%s15 + $0x14] sm:$0xf]
    %v1306 = vld [vmem:[%s15 + $0x18] sm:$0xf]
    %v1307 = vld [vmem:[%s15 + $0x1c] sm:$0xf]
    %v1308 = vld [vmem:[%s16] sm:$0x1]
    %v1310 = vlaneseq
    %v1311 = vshrl.u32 %v1310, 7
    %v1312 = vsub.s32 0, %v1311
    %v1313 = vrot.slane %v1308, %v1312
    %v1323 = vunpack.c.l.b16 %v1300
    %v1324 = vunpack.c.l.b16 %v1301
    %v1325 = vunpack.c.l.b16 %v1302
    %v1326 = vunpack.c.l.b16 %v1303
    %v1327 = vunpack.c.l.b16 %v1304
    %v1328 = vunpack.c.l.b16 %v1305
    %v1329 = vunpack.c.l.b16 %v1306
    %v1330 = vunpack.c.l.b16 %v1307
    %v1331 = vpack.c.b16 %v1324, %v1323
    %v1332 = vpack.c.b16 %v1326, %v1325
    %v1333 = vpack.c.b16 %v1328, %v1327
    %v1334 = vpack.c.b16 %v1330, %v1329
    %vm1339 = vcmask 523264
    %v1341 = vsel %vm1339, %v1299, 0
    %1343 = vmatprep.subr.bf16.mxu0 0
    %1344 = vmatpush1.bf16.msra.mxu0 0
    %1345 = vmatprep.subr.bf16.mxu0 0
    %1346 = vmatpush1.bf16.msra.mxu0 0
    %1347 = vmatprep.subr.bf16.mxu0 0
    %1348 = vmatpush1.bf16.msra.mxu0 0
    %1349 = vmatprep.subr.bf16.mxu0 0
    %1350 = vmatpush1.bf16.msra.mxu0 0
    %1351 = vmatprep.subr.bf16.mxu0 0
    %1352 = vmatpush1.bf16.msra.mxu0 %v1334
    %1353 = vmatprep.subr.bf16.mxu0 0
    %1354 = vmatpush1.bf16.msra.mxu0 %v1333
    %1355 = vmatprep.subr.bf16.mxu0 0
    %1356 = vmatpush1.bf16.msra.mxu0 %v1332
    %1357 = vmatprep.subr.bf16.mxu0 0
    %1358 = vmatpush1.bf16.msra.mxu0 %v1331
    %1359 = vmatprep.subr.bf16.mxu0 0
    %1360 = vmatpush2.bf16.msra.mxu0 0
    %1361 = vmatprep.subr.bf16.mxu0 0
    %1362 = vmatpush2.bf16.msra.mxu0 0
    %1363 = vmatprep.subr.bf16.mxu0 0
    %1364 = vmatpush2.bf16.msra.mxu0 0
    %1365 = vmatprep.subr.bf16.mxu0 0
    %1366 = vmatpush2.bf16.msra.mxu0 0
    %1367 = vmatprep.subr.bf16.mxu0 0
    %1368 = vmatpush2.bf16.msra.mxu0 0
    %1369 = vmatprep.subr.bf16.mxu0 0
    %1370 = vmatpush2.bf16.msra.mxu0 0
    %1371 = vmatprep.subr.bf16.mxu0 0
    %1372 = vmatpush2.bf16.msra.mxu0 0
    %1373 = vmatprep.subr.bf16.mxu0 0
    %1374 = vmatpush2.bf16.msra.mxu0 0
    %1375 = vmatprep.mubr.bf16.mxu0 0
    %1376 = vmatmul.mubr.bf16.gmra.mxu0 %v1341
    %v1377 = vpop.f32.mrf.mxu0
    %v1378 = vadd.f32 %v1313, %v1377
    %v1379 = vpop.f32.mrf.mxu0
    %v1380 = vpop.f32.mrf.mxu0
    %v1381 = vadd.f32 %v1313, %v1380
    %v1382 = vpop.f32.mrf.mxu0
    %1383 = vdwg.mxu0
    %v1384 = vadd.f32 %v1167, %v1378
    %v1385 = vadd.f32 %v1168, %v1381
    %s1386 = scalar_lea.vmem %s5, 1
    %v1387 = vld [vmem:[%s1386] sm:$0x1]
    %s1388 = scalar_lea.vmem %s6, 1
    %v1389 = vld [vmem:[%s1388] sm:$0x1]
    %v1390 = vsel %vm622, %v1384, 0.0
    %1391 = vadd.xlane.f32.xlu0 %v1390
    %v1392 = vpop.xlane.xlu0 %1391
    %v1393 = vsel %vm622, %v1385, 0.0
    %1394 = vadd.xlane.f32.xlu0 %v1393
    %v1395 = vpop.xlane.xlu0 %1394
    %v1396 = vmul.f32 %v1392, %v629
    %v1397 = vmul.f32 %v1395, %v629
    %v1398 = vsub.f32 %v1384, %v1396
    %v1399 = vsub.f32 %v1385, %v1397
    %v1400 = vmul.f32 %v1398, %v1398
    %v1401 = vmul.f32 %v1399, %v1399
    %v1402 = vsel %vm622, %v1400, 0.0
    %1403 = vadd.xlane.f32.xlu0 %v1402
    %v1404 = vpop.xlane.xlu0 %1403
    %v1405 = vsel %vm622, %v1401, 0.0
    %1406 = vadd.xlane.f32.xlu0 %v1405
    %v1407 = vpop.xlane.xlu0 %1406
    %v1408 = vmul.f32 %v1404, %v629
    %v1409 = vmul.f32 %v1407, %v629
    %v1410 = vadd.f32 %v1408, 1e-06
    %v1411 = vadd.f32 %v1409, 1e-06
    %v1412 = vrsqrt.pop %v1410
    %v1413 = vrsqrt.pop %v1411
    %v1414 = vmul.f32 %v1398, %v1412
    %v1415 = vmul.f32 %v1399, %v1413
    %v1417 = vlaneseq
    %v1418 = vshrl.u32 %v1417, 7
    %v1419 = vsub.s32 0, %v1418
    %v1420 = vrot.slane %v1387, %v1419
    %v1422 = vmul.f32 %v1414, %v1420
    %v1423 = vmul.f32 %v1415, %v1420
    %v1425 = vlaneseq
    %v1426 = vshrl.u32 %v1425, 7
    %v1427 = vsub.s32 0, %v1426
    %v1428 = vrot.slane %v1389, %v1427
    %v1430 = vadd.f32 %v1422, %v1428
    %v1431 = vadd.f32 %v1423, %v1428
    %v1432 = vpack.c.bf16 %v1431, %v1430
    %s1433 = scalar_lea.vmem %s7, 16
    %v1434 = vld [vmem:[%s1433] sm:$0xf]
    %v1435 = vld [vmem:[%s1433 + $0x4] sm:$0xf]
    %v1436 = vld [vmem:[%s1433 + $0x8] sm:$0xf]
    %v1437 = vld [vmem:[%s1433 + $0xc] sm:$0xf]
    %s1438 = scalar_lea.vmem %s8, 1
    %v1439 = vld [vmem:[%s1438] sm:$0x1]
    %v1441 = vlaneseq
    %v1442 = vshrl.u32 %v1441, 7
    %v1443 = vsub.s32 0, %v1442
    %v1444 = vrot.slane %v1439, %v1443
    %v1450 = vunpack.c.l.b16 %v1434
    %v1451 = vunpack.c.l.b16 %v1435
    %v1452 = vunpack.c.l.b16 %v1436
    %v1453 = vunpack.c.l.b16 %v1437
    %v1454 = vpack.c.b16 %v1451, %v1450
    %v1455 = vpack.c.b16 %v1453, %v1452
    %v1459 = vsel %vm622, %v1432, 0
    %1461 = vmatprep.subr.bf16.mxu0 0
    %1462 = vmatpush1.bf16.msra.mxu0 0
    %1463 = vmatprep.subr.bf16.mxu0 0
    %1464 = vmatpush1.bf16.msra.mxu0 0
    %1465 = vmatprep.subr.bf16.mxu0 0
    %1466 = vmatpush1.bf16.msra.mxu0 0
    %1467 = vmatprep.subr.bf16.mxu0 0
    %1468 = vmatpush1.bf16.msra.mxu0 0
    %1469 = vmatprep.subr.bf16.mxu0 0
    %1470 = vmatpush1.bf16.msra.mxu0 0
    %1471 = vmatprep.subr.bf16.mxu0 0
    %1472 = vmatpush1.bf16.msra.mxu0 0
    %1473 = vmatprep.subr.bf16.mxu0 0
    %1474 = vmatpush1.bf16.msra.mxu0 %v1455
    %1475 = vmatprep.subr.bf16.mxu0 0
    %1476 = vmatpush1.bf16.msra.mxu0 %v1454
    %1477 = vmatprep.subr.bf16.mxu0 0
    %1478 = vmatpush2.bf16.msra.mxu0 0
    %1479 = vmatprep.subr.bf16.mxu0 0
    %1480 = vmatpush2.bf16.msra.mxu0 0
    %1481 = vmatprep.subr.bf16.mxu0 0
    %1482 = vmatpush2.bf16.msra.mxu0 0
    %1483 = vmatprep.subr.bf16.mxu0 0
    %1484 = vmatpush2.bf16.msra.mxu0 0
    %1485 = vmatprep.subr.bf16.mxu0 0
    %1486 = vmatpush2.bf16.msra.mxu0 0
    %1487 = vmatprep.subr.bf16.mxu0 0
    %1488 = vmatpush2.bf16.msra.mxu0 0
    %1489 = vmatprep.subr.bf16.mxu0 0
    %1490 = vmatpush2.bf16.msra.mxu0 0
    %1491 = vmatprep.subr.bf16.mxu0 0
    %1492 = vmatpush2.bf16.msra.mxu0 0
    %1493 = vmatprep.mubr.bf16.mxu0 0
    %1494 = vmatmul.mubr.bf16.gmra.mxu0 %v1459
    %v1495 = vpop.f32.mrf.mxu0
    %v1496 = vadd.f32 %v1444, %v1495
    %v1497 = vpop.f32.mrf.mxu0
    %v1498 = vpop.f32.mrf.mxu0
    %v1499 = vadd.f32 %v1444, %v1498
    %v1500 = vpop.f32.mrf.mxu0
    %1501 = vdwg.mxu0
    %v1502 = vmul.f32 %v1496, %v739
    %v1503 = vmul.f32 %v1496, %v741
    %v1504 = vmul.f32 %v1496, %v743
    %v1505 = vmul.f32 %v1496, %v745
    %v1506 = vmul.f32 %v1499, %v739
    %v1507 = vmul.f32 %v1499, %v741
    %v1508 = vmul.f32 %v1499, %v743
    %v1509 = vmul.f32 %v1499, %v745
    %v1510 = vpack.c.bf16 %v1503, %v1502
    %v1511 = vpack.c.bf16 %v1505, %v1504
    %v1512 = vpack.c.bf16 %v1507, %v1506
    %v1513 = vpack.c.bf16 %v1509, %v1508
    %v1514 = vmul.f32 %v1496, %v763
    %v1515 = vmul.f32 %v1496, %v765
    %v1516 = vmul.f32 %v1496, %v767
    %v1517 = vmul.f32 %v1496, %v769
    %v1518 = vmul.f32 %v1499, %v763
    %v1519 = vmul.f32 %v1499, %v765
    %v1520 = vmul.f32 %v1499, %v767
    %v1521 = vmul.f32 %v1499, %v769
    %v1522 = vpack.c.bf16 %v1515, %v1514
    %v1523 = vpack.c.bf16 %v1517, %v1516
    %v1524 = vpack.c.bf16 %v1519, %v1518
    %v1525 = vpack.c.bf16 %v1521, %v1520
    %v1526 = vpack.c.bf16 %v1496, %v1496
    %v1527 = vpack.c.bf16 %v1499, %v1499
    %1530 = vrot.lane.b32.xlu0 %v1510, 96
    %v1531 = vpop.permute.xlu0 %1530
    %1532 = vrot.lane.b32.xlu0 %v1511, 96
    %v1533 = vpop.permute.xlu0 %1532
    %v1535 = vsel %vm622, %v1526, 0
    %v1538 = vsel %vm622, %v1531, 0
    %v1541 = vsel %vm622, %v1533, 0
    %1543 = vmatprep.subr.bf16.mxu0 0
    %1544 = vmatpush1.bf16.xpose.msra.mxu0 0
    %1545 = vmatprep.subr.bf16.mxu0 0
    %1546 = vmatpush1.bf16.xpose.msra.mxu0 0
    %1547 = vmatprep.subr.bf16.mxu0 0
    %1548 = vmatpush1.bf16.xpose.msra.mxu0 0
    %1549 = vmatprep.subr.bf16.mxu0 0
    %1550 = vmatpush1.bf16.xpose.msra.mxu0 0
    %1551 = vmatprep.subr.bf16.mxu0 0
    %1552 = vmatpush1.bf16.xpose.msra.mxu0 0
    %1553 = vmatprep.subr.bf16.mxu0 0
    %1554 = vmatpush1.bf16.xpose.msra.mxu0 0
    %1555 = vmatprep.subr.bf16.mxu0 0
    %1556 = vmatpush1.bf16.xpose.msra.mxu0 %v1541
    %1557 = vmatprep.subr.bf16.mxu0 0
    %1558 = vmatpush1.bf16.xpose.msra.mxu0 %v1538
    %1559 = vmatprep.subr.bf16.mxu0 0
    %1560 = vmatpush2.bf16.xpose.msra.mxu0 0
    %1561 = vmatprep.subr.bf16.mxu0 0
    %1562 = vmatpush2.bf16.xpose.msra.mxu0 0
    %1563 = vmatprep.subr.bf16.mxu0 0
    %1564 = vmatpush2.bf16.xpose.msra.mxu0 0
    %1565 = vmatprep.subr.bf16.mxu0 0
    %1566 = vmatpush2.bf16.xpose.msra.mxu0 0
    %1567 = vmatprep.subr.bf16.mxu0 0
    %1568 = vmatpush2.bf16.xpose.msra.mxu0 0
    %1569 = vmatprep.subr.bf16.mxu0 0
    %1570 = vmatpush2.bf16.xpose.msra.mxu0 0
    %1571 = vmatprep.subr.bf16.mxu0 0
    %1572 = vmatpush2.bf16.xpose.msra.mxu0 0
    %1573 = vmatprep.subr.bf16.mxu0 0
    %1574 = vmatpush2.bf16.xpose.msra.mxu0 0
    %1575 = vmatprep.mubr.bf16.mxu0 0
    %1576 = vmatmul.mubr.bf16.gmra.mxu0 %v1535
    %v1577 = vpop.f32.mrf.mxu0
    %v1578 = vadd.f32 %v619, %v1577
    %v1579 = vpop.f32.mrf.mxu0
    %v1580 = vpop.f32.mrf.mxu0
    %v1581 = vpop.f32.mrf.mxu0
    %1582 = vdwg.mxu0
    %1585 = vrot.lane.b32.xlu0 %v1512, 96
    %v1586 = vpop.permute.xlu0 %1585
    %1587 = vrot.lane.b32.xlu0 %v1513, 96
    %v1588 = vpop.permute.xlu0 %1587
    %v1590 = vsel %vm622, %v1527, 0
    %v1593 = vsel %vm622, %v1586, 0
    %v1596 = vsel %vm622, %v1588, 0
    %1598 = vmatprep.subr.bf16.mxu0 0
    %1599 = vmatpush1.bf16.xpose.msra.mxu0 0
    %1600 = vmatprep.subr.bf16.mxu0 0
    %1601 = vmatpush1.bf16.xpose.msra.mxu0 0
    %1602 = vmatprep.subr.bf16.mxu0 0
    %1603 = vmatpush1.bf16.xpose.msra.mxu0 0
    %1604 = vmatprep.subr.bf16.mxu0 0
    %1605 = vmatpush1.bf16.xpose.msra.mxu0 0
    %1606 = vmatprep.subr.bf16.mxu0 0
    %1607 = vmatpush1.bf16.xpose.msra.mxu0 0
    %1608 = vmatprep.subr.bf16.mxu0 0
    %1609 = vmatpush1.bf16.xpose.msra.mxu0 0
    %1610 = vmatprep.subr.bf16.mxu0 0
    %1611 = vmatpush1.bf16.xpose.msra.mxu0 %v1596
    %1612 = vmatprep.subr.bf16.mxu0 0
    %1613 = vmatpush1.bf16.xpose.msra.mxu0 %v1593
    %1614 = vmatprep.subr.bf16.mxu0 0
    %1615 = vmatpush2.bf16.xpose.msra.mxu0 0
    %1616 = vmatprep.subr.bf16.mxu0 0
    %1617 = vmatpush2.bf16.xpose.msra.mxu0 0
    %1618 = vmatprep.subr.bf16.mxu0 0
    %1619 = vmatpush2.bf16.xpose.msra.mxu0 0
    %1620 = vmatprep.subr.bf16.mxu0 0
    %1621 = vmatpush2.bf16.xpose.msra.mxu0 0
    %1622 = vmatprep.subr.bf16.mxu0 0
    %1623 = vmatpush2.bf16.xpose.msra.mxu0 0
    %1624 = vmatprep.subr.bf16.mxu0 0
    %1625 = vmatpush2.bf16.xpose.msra.mxu0 0
    %1626 = vmatprep.subr.bf16.mxu0 0
    %1627 = vmatpush2.bf16.xpose.msra.mxu0 0
    %1628 = vmatprep.subr.bf16.mxu0 0
    %1629 = vmatpush2.bf16.xpose.msra.mxu0 0
    %1630 = vmatprep.mubr.bf16.mxu0 0
    %1631 = vmatmul.mubr.bf16.gmra.mxu0 %v1590
    %v1632 = vpop.f32.mrf.mxu0
    %v1633 = vadd.f32 %v619, %v1632
    %v1634 = vpop.f32.mrf.mxu0
    %v1635 = vpop.f32.mrf.mxu0
    %v1636 = vpop.f32.mrf.mxu0
    %1637 = vdwg.mxu0
    %v1638 = vsel %vm622, %v1578, -inf
    %1639 = vmax.xlane.f32.xlu0 %v1638
    %v1640 = vpop.xlane.xlu0 %1639
    %v1641 = vsel %vm622, %v1633, -inf
    %1642 = vmax.xlane.f32.xlu0 %v1641
    %v1643 = vpop.xlane.xlu0 %1642
    %v1644 = vsub.f32 %v1578, %v1640
    %v1645 = vsub.f32 %v1633, %v1643
    %v1646 = vmul.f32 %v1644, 1.442695
    %v1647 = vpow.pop %v1646
    %v1648 = vmul.f32 %v1645, 1.442695
    %v1649 = vpow.pop %v1648
    %v1650 = vpack.c.bf16 %v1647, %v1647
    %v1651 = vpack.c.bf16 %v1649, %v1649
    %1654 = vrot.lane.b32.xlu0 %v1522, 64
    %v1655 = vpop.permute.xlu0 %1654
    %1656 = vrot.lane.b32.xlu0 %v1523, 64
    %v1657 = vpop.permute.xlu0 %1656
    %v1661 = vsel %vm622, %v1650, 0
    %1663 = vmatprep.subr.bf16.mxu0 0
    %1664 = vmatpush1.bf16.msra.mxu0 0
    %1665 = vmatprep.subr.bf16.mxu0 0
    %1666 = vmatpush1.bf16.msra.mxu0 0
    %1667 = vmatprep.subr.bf16.mxu0 0
    %1668 = vmatpush1.bf16.msra.mxu0 0
    %1669 = vmatprep.subr.bf16.mxu0 0
    %1670 = vmatpush1.bf16.msra.mxu0 0
    %1671 = vmatprep.subr.bf16.mxu0 0
    %1672 = vmatpush1.bf16.msra.mxu0 0
    %1673 = vmatprep.subr.bf16.mxu0 0
    %1674 = vmatpush1.bf16.msra.mxu0 0
    %1675 = vmatprep.subr.bf16.mxu0 0
    %1676 = vmatpush1.bf16.msra.mxu0 %v1657
    %1677 = vmatprep.subr.bf16.mxu0 0
    %1678 = vmatpush1.bf16.msra.mxu0 %v1655
    %1679 = vmatprep.subr.bf16.mxu0 0
    %1680 = vmatpush2.bf16.msra.mxu0 0
    %1681 = vmatprep.subr.bf16.mxu0 0
    %1682 = vmatpush2.bf16.msra.mxu0 0
    %1683 = vmatprep.subr.bf16.mxu0 0
    %1684 = vmatpush2.bf16.msra.mxu0 0
    %1685 = vmatprep.subr.bf16.mxu0 0
    %1686 = vmatpush2.bf16.msra.mxu0 0
    %1687 = vmatprep.subr.bf16.mxu0 0
    %1688 = vmatpush2.bf16.msra.mxu0 0
    %1689 = vmatprep.subr.bf16.mxu0 0
    %1690 = vmatpush2.bf16.msra.mxu0 0
    %1691 = vmatprep.subr.bf16.mxu0 0
    %1692 = vmatpush2.bf16.msra.mxu0 0
    %1693 = vmatprep.subr.bf16.mxu0 0
    %1694 = vmatpush2.bf16.msra.mxu0 0
    %1695 = vmatprep.mubr.bf16.mxu0 0
    %1696 = vmatmul.mubr.bf16.gmra.mxu0 %v1661
    %v1697 = vpop.f32.mrf.mxu0
    %v1698 = vadd.f32 0.0, %v1697
    %v1699 = vpop.f32.mrf.mxu0
    %v1700 = vpop.f32.mrf.mxu0
    %v1701 = vpop.f32.mrf.mxu0
    %1702 = vdwg.mxu0
    %1705 = vrot.lane.b32.xlu0 %v1524, 64
    %v1706 = vpop.permute.xlu0 %1705
    %1707 = vrot.lane.b32.xlu0 %v1525, 64
    %v1708 = vpop.permute.xlu0 %1707
    %v1712 = vsel %vm622, %v1651, 0
    %1714 = vmatprep.subr.bf16.mxu0 0
    %1715 = vmatpush1.bf16.msra.mxu0 0
    %1716 = vmatprep.subr.bf16.mxu0 0
    %1717 = vmatpush1.bf16.msra.mxu0 0
    %1718 = vmatprep.subr.bf16.mxu0 0
    %1719 = vmatpush1.bf16.msra.mxu0 0
    %1720 = vmatprep.subr.bf16.mxu0 0
    %1721 = vmatpush1.bf16.msra.mxu0 0
    %1722 = vmatprep.subr.bf16.mxu0 0
    %1723 = vmatpush1.bf16.msra.mxu0 0
    %1724 = vmatprep.subr.bf16.mxu0 0
    %1725 = vmatpush1.bf16.msra.mxu0 0
    %1726 = vmatprep.subr.bf16.mxu0 0
    %1727 = vmatpush1.bf16.msra.mxu0 %v1708
    %1728 = vmatprep.subr.bf16.mxu0 0
    %1729 = vmatpush1.bf16.msra.mxu0 %v1706
    %1730 = vmatprep.subr.bf16.mxu0 0
    %1731 = vmatpush2.bf16.msra.mxu0 0
    %1732 = vmatprep.subr.bf16.mxu0 0
    %1733 = vmatpush2.bf16.msra.mxu0 0
    %1734 = vmatprep.subr.bf16.mxu0 0
    %1735 = vmatpush2.bf16.msra.mxu0 0
    %1736 = vmatprep.subr.bf16.mxu0 0
    %1737 = vmatpush2.bf16.msra.mxu0 0
    %1738 = vmatprep.subr.bf16.mxu0 0
    %1739 = vmatpush2.bf16.msra.mxu0 0
    %1740 = vmatprep.subr.bf16.mxu0 0
    %1741 = vmatpush2.bf16.msra.mxu0 0
    %1742 = vmatprep.subr.bf16.mxu0 0
    %1743 = vmatpush2.bf16.msra.mxu0 0
    %1744 = vmatprep.subr.bf16.mxu0 0
    %1745 = vmatpush2.bf16.msra.mxu0 0
    %1746 = vmatprep.mubr.bf16.mxu0 0
    %1747 = vmatmul.mubr.bf16.gmra.mxu0 %v1712
    %v1748 = vpop.f32.mrf.mxu0
    %v1749 = vadd.f32 0.0, %v1748
    %v1750 = vpop.f32.mrf.mxu0
    %v1751 = vpop.f32.mrf.mxu0
    %v1752 = vpop.f32.mrf.mxu0
    %1753 = vdwg.mxu0
    %v1755 = vsel %vm622, %v1647, 0
    %v1758 = vsel %vm622, %v1649, 0
    %1760 = vmatprep.subr.mxu0 0.0
    %1761 = vmatpush1.msra.mxu0 0.0
    %1762 = vmatprep.subr.mxu0 0.0
    %1763 = vmatpush1.msra.mxu0 0.0
    %1764 = vmatprep.subr.mxu0 0.0
    %1765 = vmatpush1.msra.mxu0 0.0
    %1766 = vmatprep.subr.mxu0 0.0
    %1767 = vmatpush1.msra.mxu0 0.0
    %1768 = vmatprep.subr.mxu0 0.0
    %1769 = vmatpush1.msra.mxu0 0.0
    %1770 = vmatprep.subr.mxu0 0.0
    %1771 = vmatpush1.msra.mxu0 0.0
    %1772 = vmatprep.subr.mxu0 0.0
    %1773 = vmatpush1.msra.mxu0 0.0
    %1774 = vmatprep.subr.mxu0 0.0
    %1775 = vmatpush1.msra.mxu0 0.0
    %1776 = vmatprep.subr.mxu0 0.0
    %1777 = vmatpush1.msra.mxu0 0.0
    %1778 = vmatprep.subr.mxu0 0.0
    %1779 = vmatpush1.msra.mxu0 0.0
    %1780 = vmatprep.subr.mxu0 0.0
    %1781 = vmatpush1.msra.mxu0 0.0
    %1782 = vmatprep.subr.mxu0 0.0
    %1783 = vmatpush1.msra.mxu0 0.0
    %1784 = vmatprep.subr.mxu0 0.0
    %1785 = vmatpush1.msra.mxu0 %v618
    %1786 = vmatprep.subr.mxu0 0.0
    %1787 = vmatpush1.msra.mxu0 %v617
    %1788 = vmatprep.subr.mxu0 0.0
    %1789 = vmatpush1.msra.mxu0 %v616
    %1790 = vmatprep.subr.mxu0 0.0
    %1791 = vmatpush1.msra.mxu0 %v615
    %1792 = vmatprep.subr.mxu0 0.0
    %1793 = vmatpush2.msra.mxu0 0.0
    %1794 = vmatprep.subr.mxu0 0.0
    %1795 = vmatpush2.msra.mxu0 0.0
    %1796 = vmatprep.subr.mxu0 0.0
    %1797 = vmatpush2.msra.mxu0 0.0
    %1798 = vmatprep.subr.mxu0 0.0
    %1799 = vmatpush2.msra.mxu0 0.0
    %1800 = vmatprep.subr.mxu0 0.0
    %1801 = vmatpush2.msra.mxu0 0.0
    %1802 = vmatprep.subr.mxu0 0.0
    %1803 = vmatpush2.msra.mxu0 0.0
    %1804 = vmatprep.subr.mxu0 0.0
    %1805 = vmatpush2.msra.mxu0 0.0
    %1806 = vmatprep.subr.mxu0 0.0
    %1807 = vmatpush2.msra.mxu0 0.0
    %1808 = vmatprep.subr.mxu0 0.0
    %1809 = vmatpush2.msra.mxu0 0.0
    %1810 = vmatprep.subr.mxu0 0.0
    %1811 = vmatpush2.msra.mxu0 0.0
    %1812 = vmatprep.subr.mxu0 0.0
    %1813 = vmatpush2.msra.mxu0 0.0
    %1814 = vmatprep.subr.mxu0 0.0
    %1815 = vmatpush2.msra.mxu0 0.0
    %1816 = vmatprep.subr.mxu0 0.0
    %1817 = vmatpush2.msra.mxu0 0.0
    %1818 = vmatprep.subr.mxu0 0.0
    %1819 = vmatpush2.msra.mxu0 0.0
    %1820 = vmatprep.subr.mxu0 0.0
    %1821 = vmatpush2.msra.mxu0 0.0
    %1822 = vmatprep.subr.mxu0 0.0
    %1823 = vmatpush2.msra.mxu0 0.0
    %1824 = vmatprep.mubr.f32.mxu0 0.0
    %1825 = vmatmul.mubr.f32.gmra.mxu0 %v1755
    %v1826 = vpop.f32.mrf.mxu0
    %v1827 = vadd.f32 0.0, %v1826
    %v1828 = vpop.f32.mrf.mxu0
    %1829 = vmatprep.mubr.f32.mxu0 0.0
    %1830 = vmatmul.mubr.f32.gmra.mxu0 %v1758
    %v1831 = vpop.f32.mrf.mxu0
    %v1832 = vadd.f32 0.0, %v1831
    %v1833 = vpop.f32.mrf.mxu0
    %1834 = vdwg.mxu0
    %v1835 = vrcp.pop %v1827
    %v1836 = vrcp.pop %v1832
    %v1837 = vmul.f32 %v1698, %v1835
    %v1838 = vmul.f32 %v1749, %v1836
    %v1839 = vpack.c.bf16 %v1838, %v1837
    %s1840 = scalar_lea.vmem %s9, 16
    %v1841 = vld [vmem:[%s1840] sm:$0xf]
    %v1842 = vld [vmem:[%s1840 + $0x4] sm:$0xf]
    %v1843 = vld [vmem:[%s1840 + $0x8] sm:$0xf]
    %v1844 = vld [vmem:[%s1840 + $0xc] sm:$0xf]
    %s1845 = scalar_lea.vmem %s10, 1
    %v1846 = vld [vmem:[%s1845] sm:$0x1]
    %v1848 = vlaneseq
    %v1849 = vshrl.u32 %v1848, 7
    %v1850 = vsub.s32 0, %v1849
    %v1851 = vrot.slane %v1846, %v1850
    %v1857 = vunpack.c.l.b16 %v1841
    %v1858 = vunpack.c.l.b16 %v1842
    %v1859 = vunpack.c.l.b16 %v1843
    %v1860 = vunpack.c.l.b16 %v1844
    %v1861 = vpack.c.b16 %v1858, %v1857
    %v1862 = vpack.c.b16 %v1860, %v1859
    %v1866 = vsel %vm622, %v1839, 0
    %1868 = vmatprep.subr.bf16.mxu0 0
    %1869 = vmatpush1.bf16.msra.mxu0 0
    %1870 = vmatprep.subr.bf16.mxu0 0
    %1871 = vmatpush1.bf16.msra.mxu0 0
    %1872 = vmatprep.subr.bf16.mxu0 0
    %1873 = vmatpush1.bf16.msra.mxu0 0
    %1874 = vmatprep.subr.bf16.mxu0 0
    %1875 = vmatpush1.bf16.msra.mxu0 0
    %1876 = vmatprep.subr.bf16.mxu0 0
    %1877 = vmatpush1.bf16.msra.mxu0 0
    %1878 = vmatprep.subr.bf16.mxu0 0
    %1879 = vmatpush1.bf16.msra.mxu0 0
    %1880 = vmatprep.subr.bf16.mxu0 0
    %1881 = vmatpush1.bf16.msra.mxu0 %v1862
    %1882 = vmatprep.subr.bf16.mxu0 0
    %1883 = vmatpush1.bf16.msra.mxu0 %v1861
    %1884 = vmatprep.subr.bf16.mxu0 0
    %1885 = vmatpush2.bf16.msra.mxu0 0
    %1886 = vmatprep.subr.bf16.mxu0 0
    %1887 = vmatpush2.bf16.msra.mxu0 0
    %1888 = vmatprep.subr.bf16.mxu0 0
    %1889 = vmatpush2.bf16.msra.mxu0 0
    %1890 = vmatprep.subr.bf16.mxu0 0
    %1891 = vmatpush2.bf16.msra.mxu0 0
    %1892 = vmatprep.subr.bf16.mxu0 0
    %1893 = vmatpush2.bf16.msra.mxu0 0
    %1894 = vmatprep.subr.bf16.mxu0 0
    %1895 = vmatpush2.bf16.msra.mxu0 0
    %1896 = vmatprep.subr.bf16.mxu0 0
    %1897 = vmatpush2.bf16.msra.mxu0 0
    %1898 = vmatprep.subr.bf16.mxu0 0
    %1899 = vmatpush2.bf16.msra.mxu0 0
    %1900 = vmatprep.mubr.bf16.mxu0 0
    %1901 = vmatmul.mubr.bf16.gmra.mxu0 %v1866
    %v1902 = vpop.f32.mrf.mxu0
    %v1903 = vadd.f32 %v1851, %v1902
    %v1904 = vpop.f32.mrf.mxu0
    %v1905 = vpop.f32.mrf.mxu0
    %v1906 = vadd.f32 %v1851, %v1905
    %v1907 = vpop.f32.mrf.mxu0
    %1908 = vdwg.mxu0
    %v1909 = vadd.f32 %v1384, %v1903
    %v1910 = vadd.f32 %v1385, %v1906
    %s1911 = scalar_lea.vmem %s11, 1
    %v1912 = vld [vmem:[%s1911] sm:$0x1]
    %s1913 = scalar_lea.vmem %s12, 1
    %v1914 = vld [vmem:[%s1913] sm:$0x1]
    %v1915 = vsel %vm622, %v1909, 0.0
    %1916 = vadd.xlane.f32.xlu0 %v1915
    %v1917 = vpop.xlane.xlu0 %1916
    %v1918 = vsel %vm622, %v1910, 0.0
    %1919 = vadd.xlane.f32.xlu0 %v1918
    %v1920 = vpop.xlane.xlu0 %1919
    %v1921 = vmul.f32 %v1917, %v629
    %v1922 = vmul.f32 %v1920, %v629
    %v1923 = vsub.f32 %v1909, %v1921
    %v1924 = vsub.f32 %v1910, %v1922
    %v1925 = vmul.f32 %v1923, %v1923
    %v1926 = vmul.f32 %v1924, %v1924
    %v1927 = vsel %vm622, %v1925, 0.0
    %1928 = vadd.xlane.f32.xlu0 %v1927
    %v1929 = vpop.xlane.xlu0 %1928
    %v1930 = vsel %vm622, %v1926, 0.0
    %1931 = vadd.xlane.f32.xlu0 %v1930
    %v1932 = vpop.xlane.xlu0 %1931
    %v1933 = vmul.f32 %v1929, %v629
    %v1934 = vmul.f32 %v1932, %v629
    %v1935 = vadd.f32 %v1933, 1e-06
    %v1936 = vadd.f32 %v1934, 1e-06
    %v1937 = vrsqrt.pop %v1935
    %v1938 = vrsqrt.pop %v1936
    %v1939 = vmul.f32 %v1923, %v1937
    %v1940 = vmul.f32 %v1924, %v1938
    %v1942 = vlaneseq
    %v1943 = vshrl.u32 %v1942, 7
    %v1944 = vsub.s32 0, %v1943
    %v1945 = vrot.slane %v1912, %v1944
    %v1947 = vmul.f32 %v1939, %v1945
    %v1948 = vmul.f32 %v1940, %v1945
    %v1950 = vlaneseq
    %v1951 = vshrl.u32 %v1950, 7
    %v1952 = vsub.s32 0, %v1951
    %v1953 = vrot.slane %v1914, %v1952
    %v1955 = vadd.f32 %v1947, %v1953
    %v1956 = vadd.f32 %v1948, %v1953
    %v1957 = vpack.c.bf16 %v1956, %v1955
    %s1958 = scalar_lea.vmem %s13, 16
    %v1959 = vld [vmem:[%s1958] sm:$0xf]
    %v1960 = vld [vmem:[%s1958 + $0x4] sm:$0xf]
    %v1961 = vld [vmem:[%s1958 + $0x8] sm:$0xf]
    %v1962 = vld [vmem:[%s1958 + $0xc] sm:$0xf]
    %s1963 = scalar_lea.vmem %s14, 1
    %v1964 = vld [vmem:[%s1963] sm:$0x1]
    %v1966 = vlaneseq
    %v1967 = vshrl.u32 %v1966, 7
    %v1968 = vsub.s32 0, %v1967
    %v1969 = vrot.slane %v1964, %v1968
    %v1975 = vunpack.c.l.b16 %v1959
    %v1976 = vunpack.c.l.b16 %v1960
    %v1977 = vunpack.c.l.b16 %v1961
    %v1978 = vunpack.c.l.b16 %v1962
    %v1979 = vpack.c.b16 %v1976, %v1975
    %v1980 = vpack.c.b16 %v1978, %v1977
    %v1984 = vsel %vm622, %v1957, 0
    %1986 = vmatprep.subr.bf16.mxu0 0
    %1987 = vmatpush1.bf16.msra.mxu0 0
    %1988 = vmatprep.subr.bf16.mxu0 0
    %1989 = vmatpush1.bf16.msra.mxu0 0
    %1990 = vmatprep.subr.bf16.mxu0 0
    %1991 = vmatpush1.bf16.msra.mxu0 0
    %1992 = vmatprep.subr.bf16.mxu0 0
    %1993 = vmatpush1.bf16.msra.mxu0 0
    %1994 = vmatprep.subr.bf16.mxu0 0
    %1995 = vmatpush1.bf16.msra.mxu0 0
    %1996 = vmatprep.subr.bf16.mxu0 0
    %1997 = vmatpush1.bf16.msra.mxu0 0
    %1998 = vmatprep.subr.bf16.mxu0 0
    %1999 = vmatpush1.bf16.msra.mxu0 %v1980
    %2000 = vmatprep.subr.bf16.mxu0 0
    %2001 = vmatpush1.bf16.msra.mxu0 %v1979
    %2002 = vmatprep.subr.bf16.mxu0 0
    %2003 = vmatpush2.bf16.msra.mxu0 0
    %2004 = vmatprep.subr.bf16.mxu0 0
    %2005 = vmatpush2.bf16.msra.mxu0 0
    %2006 = vmatprep.subr.bf16.mxu0 0
    %2007 = vmatpush2.bf16.msra.mxu0 0
    %2008 = vmatprep.subr.bf16.mxu0 0
    %2009 = vmatpush2.bf16.msra.mxu0 0
    %2010 = vmatprep.subr.bf16.mxu0 0
    %2011 = vmatpush2.bf16.msra.mxu0 0
    %2012 = vmatprep.subr.bf16.mxu0 0
    %2013 = vmatpush2.bf16.msra.mxu0 0
    %2014 = vmatprep.subr.bf16.mxu0 0
    %2015 = vmatpush2.bf16.msra.mxu0 0
    %2016 = vmatprep.subr.bf16.mxu0 0
    %2017 = vmatpush2.bf16.msra.mxu0 0
    %2018 = vmatprep.mubr.bf16.mxu0 0
    %2019 = vmatmul.mubr.bf16.gmra.mxu0 %v1984
    %v2020 = vpop.f32.mrf.mxu0
    %v2021 = vadd.f32 %v1969, %v2020
    %v2022 = vpop.f32.mrf.mxu0
    %v2023 = vpop.f32.mrf.mxu0
    %v2024 = vadd.f32 %v1969, %v2023
    %v2025 = vpop.f32.mrf.mxu0
    %2026 = vdwg.mxu0
    %v2027 = vmul.f32 %v2021, %v2021
    %v2028 = vmul.f32 %v2024, %v2024
    %v2029 = vmul.f32 %v2021, %v2027
    %v2030 = vmul.f32 %v2024, %v2028
    %v2031 = vmul.f32 %v2029, 0.044715
    %v2032 = vmul.f32 %v2030, 0.044715
    %v2033 = vadd.f32 %v2021, %v2031
    %v2034 = vadd.f32 %v2024, %v2032
    %v2035 = vmul.f32 %v2033, 0.7978846
    %v2036 = vmul.f32 %v2034, 0.7978846
    %v2037 = vtanh.pop %v2035
    %v2038 = vtanh.pop %v2036
    %v2039 = vadd.f32 %v2037, 1.0
    %v2040 = vadd.f32 %v2038, 1.0
    %v2041 = vmul.f32 %v2039, 0.5
    %v2042 = vmul.f32 %v2040, 0.5
    %v2043 = vmul.f32 %v2021, %v2041
    %v2044 = vmul.f32 %v2024, %v2042
    %v2045 = vpack.c.bf16 %v2044, %v2043
    %s2046 = scalar_lea.vmem %s15, 32
    %v2047 = vld [vmem:[%s2046] sm:$0xf]
    %v2048 = vld [vmem:[%s2046 + $0x4] sm:$0xf]
    %v2049 = vld [vmem:[%s2046 + $0x8] sm:$0xf]
    %v2050 = vld [vmem:[%s2046 + $0xc] sm:$0xf]
    %v2051 = vld [vmem:[%s2046 + $0x10] sm:$0xf]
    %v2052 = vld [vmem:[%s2046 + $0x14] sm:$0xf]
    %v2053 = vld [vmem:[%s2046 + $0x18] sm:$0xf]
    %v2054 = vld [vmem:[%s2046 + $0x1c] sm:$0xf]
    %s2055 = scalar_lea.vmem %s16, 1
    %v2056 = vld [vmem:[%s2055] sm:$0x1]
    %v2058 = vlaneseq
    %v2059 = vshrl.u32 %v2058, 7
    %v2060 = vsub.s32 0, %v2059
    %v2061 = vrot.slane %v2056, %v2060
    %v2071 = vunpack.c.l.b16 %v2047
    %v2072 = vunpack.c.l.b16 %v2048
    %v2073 = vunpack.c.l.b16 %v2049
    %v2074 = vunpack.c.l.b16 %v2050
    %v2075 = vunpack.c.l.b16 %v2051
    %v2076 = vunpack.c.l.b16 %v2052
    %v2077 = vunpack.c.l.b16 %v2053
    %v2078 = vunpack.c.l.b16 %v2054
    %v2079 = vpack.c.b16 %v2072, %v2071
    %v2080 = vpack.c.b16 %v2074, %v2073
    %v2081 = vpack.c.b16 %v2076, %v2075
    %v2082 = vpack.c.b16 %v2078, %v2077
    %v2088 = vsel %vm1339, %v2045, 0
    %2090 = vmatprep.subr.bf16.mxu0 0
    %2091 = vmatpush1.bf16.msra.mxu0 0
    %2092 = vmatprep.subr.bf16.mxu0 0
    %2093 = vmatpush1.bf16.msra.mxu0 0
    %2094 = vmatprep.subr.bf16.mxu0 0
    %2095 = vmatpush1.bf16.msra.mxu0 0
    %2096 = vmatprep.subr.bf16.mxu0 0
    %2097 = vmatpush1.bf16.msra.mxu0 0
    %2098 = vmatprep.subr.bf16.mxu0 0
    %2099 = vmatpush1.bf16.msra.mxu0 %v2082
    %2100 = vmatprep.subr.bf16.mxu0 0
    %2101 = vmatpush1.bf16.msra.mxu0 %v2081
    %2102 = vmatprep.subr.bf16.mxu0 0
    %2103 = vmatpush1.bf16.msra.mxu0 %v2080
    %2104 = vmatprep.subr.bf16.mxu0 0
    %2105 = vmatpush1.bf16.msra.mxu0 %v2079
    %2106 = vmatprep.subr.bf16.mxu0 0
    %2107 = vmatpush2.bf16.msra.mxu0 0
    %2108 = vmatprep.subr.bf16.mxu0 0
    %2109 = vmatpush2.bf16.msra.mxu0 0
    %2110 = vmatprep.subr.bf16.mxu0 0
    %2111 = vmatpush2.bf16.msra.mxu0 0
    %2112 = vmatprep.subr.bf16.mxu0 0
    %2113 = vmatpush2.bf16.msra.mxu0 0
    %2114 = vmatprep.subr.bf16.mxu0 0
    %2115 = vmatpush2.bf16.msra.mxu0 0
    %2116 = vmatprep.subr.bf16.mxu0 0
    %2117 = vmatpush2.bf16.msra.mxu0 0
    %2118 = vmatprep.subr.bf16.mxu0 0
    %2119 = vmatpush2.bf16.msra.mxu0 0
    %2120 = vmatprep.subr.bf16.mxu0 0
    %2121 = vmatpush2.bf16.msra.mxu0 0
    %2122 = vmatprep.mubr.bf16.mxu0 0
    %2123 = vmatmul.mubr.bf16.gmra.mxu0 %v2088
    %v2124 = vpop.f32.mrf.mxu0
    %v2125 = vadd.f32 %v2061, %v2124
    %v2126 = vpop.f32.mrf.mxu0
    %v2127 = vpop.f32.mrf.mxu0
    %v2128 = vadd.f32 %v2061, %v2127
    %v2129 = vpop.f32.mrf.mxu0
    %2130 = vdwg.mxu0
    %v2131 = vadd.f32 %v1909, %v2125
    %v2132 = vadd.f32 %v1910, %v2128
    %v2133 = vld [vmem:[%s17] sm:$0x1]
    %v2134 = vld [vmem:[%s18] sm:$0x1]
    %v2137 = vrot.slane %v2132, 7
    %vm2138 = vcmask 1041409
    %v2139 = vsel %vm2138, %v2137, %v2131
    %vm2141 = vcmask 254976
    %v2142 = vsel %vm2141, %v2139, 0.0
    %2143 = vadd.xlane.f32.xlu0 %v2142
    %v2144 = vpop.xlane.xlu0 %2143
    %v2145 = vmul.f32 %v2144, %v629
    %v2147 = vrot.slane %v2145, 1
    %v2150 = vsub.f32 %v2131, %v2145
    %v2151 = vsub.f32 %v2132, %v2147
    %v2152 = vmul.f32 %v2150, %v2150
    %v2153 = vmul.f32 %v2151, %v2151
    %v2156 = vrot.slane %v2153, 7
    %v2157 = vsel %vm2138, %v2156, %v2152
    %v2159 = vsel %vm2141, %v2157, 0.0
    %2160 = vadd.xlane.f32.xlu0 %v2159
    %v2161 = vpop.xlane.xlu0 %2160
    %v2162 = vmul.f32 %v2161, %v629
    %v2163 = vadd.f32 %v2162, 1e-06
    %v2164 = vrsqrt.pop %v2163
    %v2166 = vrot.slane %v2164, 1
    %v2169 = vmul.f32 %v2150, %v2164
    %v2170 = vmul.f32 %v2151, %v2166
    %v2172 = vlaneseq
    %v2173 = vshrl.u32 %v2172, 7
    %v2174 = vsub.s32 0, %v2173
    %v2175 = vrot.slane %v2133, %v2174
    %v2177 = vmul.f32 %v2169, %v2175
    %v2178 = vmul.f32 %v2170, %v2175
    %v2180 = vlaneseq
    %v2181 = vshrl.u32 %v2180, 7
    %v2182 = vsub.s32 0, %v2181
    %v2183 = vrot.slane %v2134, %v2182
    %v2185 = vadd.f32 %v2177, %v2183
    %v2186 = vadd.f32 %v2178, %v2183
    %v2187 = vpack.c.bf16 %v2185, %v2185
    %v2188 = vpack.c.bf16 %v2186, %v2186
    %v2189 = vld [vmem:[%s19] sm:$0xf]
    %v2190 = vld [vmem:[%s19 + $0x4] sm:$0xf]
    %v2191 = vld [vmem:[%s19 + $0x8] sm:$0xf]
    %v2192 = vld [vmem:[%s19 + $0xc] sm:$0xf]
    %v2193 = vld [vmem:[%s20] sm:$0x1]
    %v2195 = vlaneseq
    %v2196 = vshrl.u32 %v2195, 7
    %v2197 = vsub.s32 0, %v2196
    %v2198 = vrot.slane %v2193, %v2197
    %v2202 = vunpack.c.l.b16 %v2187
    %v2203 = vunpack.c.l.b16 %v2188
    %v2204 = vrot.slane %v2203, 7
    %v2205 = vsel %vm2138, %v2204, %v2202
    %v2206 = vpack.c.b16 %v2205, %v2205
    %v2211 = vunpack.c.l.b16 %v2189
    %v2212 = vunpack.c.l.b16 %v2190
    %v2213 = vunpack.c.l.b16 %v2191
    %v2214 = vunpack.c.l.b16 %v2192
    %v2215 = vpack.c.b16 %v2212, %v2211
    %v2216 = vpack.c.b16 %v2214, %v2213
    %v2220 = vsel %vm622, %v2206, 0
    %2222 = vmatprep.subr.bf16.mxu0 0
    %2223 = vmatpush1.bf16.msra.mxu0 0
    %2224 = vmatprep.subr.bf16.mxu0 0
    %2225 = vmatpush1.bf16.msra.mxu0 0
    %2226 = vmatprep.subr.bf16.mxu0 0
    %2227 = vmatpush1.bf16.msra.mxu0 0
    %2228 = vmatprep.subr.bf16.mxu0 0
    %2229 = vmatpush1.bf16.msra.mxu0 0
    %2230 = vmatprep.subr.bf16.mxu0 0
    %2231 = vmatpush1.bf16.msra.mxu0 0
    %2232 = vmatprep.subr.bf16.mxu0 0
    %2233 = vmatpush1.bf16.msra.mxu0 0
    %2234 = vmatprep.subr.bf16.mxu0 0
    %2235 = vmatpush1.bf16.msra.mxu0 %v2216
    %2236 = vmatprep.subr.bf16.mxu0 0
    %2237 = vmatpush1.bf16.msra.mxu0 %v2215
    %2238 = vmatprep.subr.bf16.mxu0 0
    %2239 = vmatpush2.bf16.msra.mxu0 0
    %2240 = vmatprep.subr.bf16.mxu0 0
    %2241 = vmatpush2.bf16.msra.mxu0 0
    %2242 = vmatprep.subr.bf16.mxu0 0
    %2243 = vmatpush2.bf16.msra.mxu0 0
    %2244 = vmatprep.subr.bf16.mxu0 0
    %2245 = vmatpush2.bf16.msra.mxu0 0
    %2246 = vmatprep.subr.bf16.mxu0 0
    %2247 = vmatpush2.bf16.msra.mxu0 0
    %2248 = vmatprep.subr.bf16.mxu0 0
    %2249 = vmatpush2.bf16.msra.mxu0 0
    %2250 = vmatprep.subr.bf16.mxu0 0
    %2251 = vmatpush2.bf16.msra.mxu0 0
    %2252 = vmatprep.subr.bf16.mxu0 0
    %2253 = vmatpush2.bf16.msra.mxu0 0
    %2254 = vmatprep.mubr.bf16.mxu0 0
    %2255 = vmatmul.mubr.bf16.gmra.mxu0 %v2220
    %v2256 = vpop.f32.mrf.mxu0
    %v2257 = vadd.f32 %v2198, %v2256
    %v2258 = vpop.f32.mrf.mxu0
    %v2259 = vpop.f32.mrf.mxu0
    %v2260 = vpop.f32.mrf.mxu0
    %2261 = vdwg.mxu0
    %2262 = vst [vmem:[#allocation2] sm:$0x3] %v2257
    // Predicated region
    $region86: #{vit_forward.1} parent=1 // pred_check
      _
    $region87: #{vit_forward.1} parent=1 // pred_check_branch
      %2264 = sbr.rel (0) target = $region89
    $region88: #{vit_forward.1} parent=1 // pred_region
      %s2266 = ssub.s32 32, 32
      %2267 = vsyncadd [#allocation3], %s2266
      %s2269 = sshll.u32 [#allocation2], 4
      %s2270 = int_to_ptr.vmem [resolvable:$true] %s2269
      %2272 = dma.vmem_to_hbm [thread:$0]  %s2270, 32, %s21, [#allocation3]
    $region89: #{vit_forward.1} parent=1 // pred_fallthru
      _
    // Predicated region
    $region90: #{vit_forward.1} parent=1 // pred_check
      _
    $region91: #{vit_forward.1} parent=1 // pred_check_branch
      %2274 = sbr.rel (0) target = $region93
    $region92: #{vit_forward.1} parent=1 // pred_region
      %2275 = dma.done [#allocation3], 32
    $region93: #{vit_forward.1} parent=1 // pred_fallthru
      _
    %2276 = vsyncpa [#allocation3], 1

</llo_original>
